<compile_context>
chip_gen: v6e
topology: v6e:2x2x1
jax: 0.10.0
libtpu: 0.0.40
codegen_flags: <defaults>
</compile_context>

<pallas_src>
import jax
import jax.numpy as jnp
from jax.experimental import pallas as pl
from jax.experimental.pallas import tpu as pltpu


def _round_up(x, m):
    return ((x + m - 1) // m) * m


def _make_decoder_kernel(num_layers, T, B, H, matmul_dtype):
    """Fused (num_layers x LSTM, wavefronted) + Linear forward kernel.

    Ref order (all full-array VMEM, no grid):
      inputs : x2d (T*B, I) bf16, h0 (L, B, H) f32, c0 (L, B, H) f32,
               layer 0: wih_t (I, 4H) bf16, whh_t (H, 4H) bf16, bias (1, 4H) f32,
               layers>0: wcomb_t (2H, 4H) bf16, bias (1, 4H) f32,
               then: wlin_t (H, O_pad) bf16, blin (1, O_pad) f32
      outputs: out (T*B, O_pad) f32, h_n (L, B, H) f32, c_n (L, B, H) f32
    """
    L = num_layers

    def kernel(*refs):
        x_ref, h0_ref, c0_ref = refs[0], refs[1], refs[2]
        idx = 3
        wih0_ref, whh0_ref, b0_ref = refs[idx], refs[idx + 1], refs[idx + 2]
        idx += 3
        wcomb_refs, bias_refs = [], []
        for _ in range(1, L):
            wcomb_refs.append(refs[idx])
            bias_refs.append(refs[idx + 1])
            idx += 2
        wlin_ref, blin_ref = refs[idx], refs[idx + 1]
        idx += 2
        out_ref, hn_ref, cn_ref = refs[idx], refs[idx + 1], refs[idx + 2]

        # ---- hoisted, loop-invariant weight loads --------------------------------
        whh0 = whh0_ref[...]                                   # (H, 4H)   bf16
        wcombs = [r[...] for r in wcomb_refs]                  # (2H, 4H)  bf16
        biases = [r[...] for r in bias_refs]                   # (1, 4H)   f32

        # ---- layer-0 input projection hoisted: ONE whole-sequence matmul ---------
        seq = x_ref[...]                                       # (T*B, I)  bf16
        gx0 = (jnp.dot(seq, wih0_ref[...], preferred_element_type=jnp.float32)
               + b0_ref[...])                                  # (T*B, 4H) f32

        # ---- per-layer recurrent state as traced values (no VMEM round-trip) -----
        h = [h0_ref[l] for l in range(L)]                      # (B, H) f32
        c = [c0_ref[l] for l in range(L)]
        y = [None] * L                                         # latest output per layer
        final_ys = []                                          # last layer's outputs, in time order

        def lstm_cell(gates, c_prev):
            # g-gate quadrant of weights/bias was pre-scaled by 2 at init, so
            # tanh(x) = 2*sigmoid(2x) - 1 needs only the single sigmoid pass below.
            sig = jax.nn.sigmoid(gates)                        # (B, 4H), lane-dense EUP pass
            i_g = sig[:, 0:H]
            f_g = sig[:, H:2 * H]
            g_g = 2.0 * sig[:, 2 * H:3 * H] - 1.0              # == tanh(pre-activation)
            o_g = sig[:, 3 * H:4 * H]
            c_new = f_g * c_prev + i_g * g_g
            h_new = o_g * jnp.tanh(c_new)
            return h_new, c_new

        # ---- wavefront over (time, layer): layer l handles time t at step s=t+l --
        # Every layer active in step s depends only on step s-1 values, so the
        # per-step chains are independent and can be co-issued on MXU/VPU/EUP.
        for s in range(T + L - 1):
            y_prev = list(y)                                   # snapshot of step s-1 outputs
            for l in range(L):
                t = s - l
                if t < 0 or t >= T:
                    continue
                if l == 0:
                    gates = gx0[t * B:(t + 1) * B, :] + jnp.dot(
                        h[0].astype(matmul_dtype), whh0,
                        preferred_element_type=jnp.float32)    # (B, 4H)
                else:
                    # Fused per-step projection: [x_t, h_{t-1}] @ [[W_ih^T],[W_hh^T]]
                    inp = jnp.concatenate([y_prev[l - 1], h[l]],
                                          axis=1).astype(matmul_dtype)   # (B, 2H)
                    gates = (jnp.dot(inp, wcombs[l - 1],
                                     preferred_element_type=jnp.float32)
                             + biases[l - 1])
                h_new, c_new = lstm_cell(gates, c[l])
                h[l], c[l], y[l] = h_new, c_new, h_new
                if l == L - 1:
                    final_ys.append(h_new)

        for l in range(L):
            hn_ref[l] = h[l]
            cn_ref[l] = c[l]

        # Dropout (eval mode) = identity; fused Linear over the whole output
        # sequence with a lane-dense 128-padded output slab (unmasked stores).
        yseq = jnp.concatenate(final_ys, axis=0).astype(matmul_dtype)    # (T*B, H)
        out_ref[...] = (jnp.dot(yseq, wlin_ref[...],
                                preferred_element_type=jnp.float32)
                        + blin_ref[...])

    return kernel


class DecoderRNNPallas:
    def __init__(self, hidden_size, output_size, hidden_dim, num_layers,
                 dropout=0.5, key=None, matmul_dtype=jnp.bfloat16):
        self.hidden_size = hidden_size
        self.output_size = output_size
        self.hidden_dim = hidden_dim
        self.num_layers = num_layers
        self.dropout_p = dropout                     # eval-mode: identity
        self.matmul_dtype = matmul_dtype
        self.out_pad = _round_up(output_size, 128)   # lane-dense linear output

        key = jax.random.PRNGKey(0) if key is None else key
        H = hidden_dim
        k = 1.0 / jnp.sqrt(jnp.float32(hidden_dim))

        def scale_g_cols(w_t):
            # Scale the g-gate (cell) quadrant by 2 (exact power-of-2) so the
            # kernel can use tanh(x) = 2*sigmoid(2x) - 1 with a single EUP pass.
            return w_t.at[:, 2 * H:3 * H].multiply(2.0)

        self.torch_params = []        # original f32 (w_ih, w_hh, b_ih, b_hh) — reference
        self.kernel_layer_args = []   # kernel-ready (transposed, g-scaled, bf16/f32)
        for layer in range(num_layers):
            in_dim = hidden_size if layer == 0 else hidden_dim
            key, k1, k2, k3, k4 = jax.random.split(key, 5)
            w_ih = jax.random.uniform(k1, (4 * H, in_dim), jnp.float32, -k, k)
            w_hh = jax.random.uniform(k2, (4 * H, H), jnp.float32, -k, k)
            b_ih = jax.random.uniform(k3, (4 * H,), jnp.float32, -k, k)
            b_hh = jax.random.uniform(k4, (4 * H,), jnp.float32, -k, k)
            self.torch_params.append((w_ih, w_hh, b_ih, b_hh))

            wih_t = scale_g_cols(jnp.transpose(w_ih)).astype(matmul_dtype)   # (I_l, 4H)
            whh_t = scale_g_cols(jnp.transpose(w_hh)).astype(matmul_dtype)   # (H, 4H)
            bias = ((b_ih + b_hh).at[2 * H:3 * H].multiply(2.0)
                    .reshape(1, 4 * H))                                      # f32
            if layer == 0:
                self.kernel_layer_args.extend([wih_t, whh_t, bias])
            else:
                # Fused [[W_ih^T],[W_hh^T]] so layers>0 do one per-step matmul (K=2H).
                self.kernel_layer_args.extend(
                    [jnp.concatenate([wih_t, whh_t], axis=0), bias])

        key, k5, k6 = jax.random.split(key, 3)
        self.lin_w = jax.random.uniform(k5, (output_size, H), jnp.float32, -k, k)
        self.lin_b = jax.random.uniform(k6, (output_size,), jnp.float32, -k, k)
        wlin = jnp.zeros((H, self.out_pad), jnp.float32)
        self.lin_w_t_pad = wlin.at[:, :output_size].set(
            jnp.transpose(self.lin_w)).astype(matmul_dtype)
        blin = jnp.zeros((1, self.out_pad), jnp.float32)
        self.lin_b_pad = blin.at[:, :output_size].set(self.lin_b)

    def __call__(self, encoded_input, hidden):
        """encoded_input: (B, T, hidden_size) batch_first.
        hidden: (h0, c0), each (num_layers, B, hidden_dim).
        Returns (decoded_output (B, T, output_size), (h_n, c_n))."""
        h0, c0 = hidden
        B, T, _ = encoded_input.shape
        H = self.hidden_dim
        L = self.num_layers
        O = self.output_size
        Op = self.out_pad

        # Time-major flattening: row index = t*B + b; cast once for bf16 matmuls.
        x2d = (jnp.transpose(encoded_input, (1, 0, 2))
               .reshape(T * B, self.hidden_size).astype(self.matmul_dtype))

        args = [x2d, h0.astype(jnp.float32), c0.astype(jnp.float32)]
        args.extend(self.kernel_layer_args)
        args.extend([self.lin_w_t_pad, self.lin_b_pad])

        vmem = pl.BlockSpec(memory_space=pltpu.MemorySpace.VMEM)
        kernel = _make_decoder_kernel(L, T, B, H, self.matmul_dtype)
        out_flat, h_n, c_n = pl.pallas_call(
            kernel,
            out_shape=(
                jax.ShapeDtypeStruct((T * B, Op), jnp.float32),
                jax.ShapeDtypeStruct((L, B, H), jnp.float32),
                jax.ShapeDtypeStruct((L, B, H), jnp.float32),
            ),
            in_specs=[vmem] * len(args),
            out_specs=(vmem, vmem, vmem),
        )(*args)

        out = jnp.transpose(out_flat[:, :O].reshape(T, B, O), (1, 0, 2))
        return out, (h_n, c_n)


# ------------------------------ pure-JAX reference -----------------------------
def reference_forward(model, x, hidden):
    """Standard LSTM math with the original (un-scaled, un-fused) f32 weights.
    Matmul operands are cast to model.matmul_dtype with f32 accumulation so the
    check isolates kernel logic errors from bf16 quantization."""
    dt = model.matmul_dtype
    h0, c0 = hidden
    layer_in = jnp.transpose(x.astype(jnp.float32), (1, 0, 2))   # (T, B, I)
    h_fin, c_fin = [], []
    for l, (w_ih, w_hh, b_ih, b_hh) in enumerate(model.torch_params):
        wih_t = jnp.transpose(w_ih).astype(dt)
        whh_t = jnp.transpose(w_hh).astype(dt)
        b = (b_ih + b_hh).reshape(1, -1)

        def step(carry, x_t, wih_t=wih_t, whh_t=whh_t, b=b):
            h, c = carry
            gates = (jnp.dot(x_t.astype(dt), wih_t, preferred_element_type=jnp.float32)
                     + jnp.dot(h.astype(dt), whh_t, preferred_element_type=jnp.float32)
                     + b)
            i, f, g, o = jnp.split(gates, 4, axis=-1)
            i, f, o = jax.nn.sigmoid(i), jax.nn.sigmoid(f), jax.nn.sigmoid(o)
            g = jnp.tanh(g)
            c = f * c + i * g
            h = o * jnp.tanh(c)
            return (h, c), h

        (h_n, c_n), ys = jax.lax.scan(step, (h0[l], c0[l]), layer_in)
        layer_in = ys
        h_fin.append(h_n)
        c_fin.append(c_n)
    out = (jnp.dot(layer_in.astype(dt), jnp.transpose(model.lin_w).astype(dt),
                   preferred_element_type=jnp.float32) + model.lin_b)   # (T, B, O)
    return jnp.transpose(out, (1, 0, 2)), (jnp.stack(h_fin), jnp.stack(c_fin))


if __name__ == "__main__":
    B, T = 2, 8
    hidden_size = 32     # LSTM input feature size
    hidden_dim = 32      # LSTM hidden size
    output_size = 16
    num_layers = 2

    model = DecoderRNNPallas(hidden_size, output_size, hidden_dim, num_layers,
                             dropout=0.5, key=jax.random.PRNGKey(0))

    key = jax.random.PRNGKey(0)
    kx, kh, kc = jax.random.split(key, 3)
    x = jax.random.normal(kx, (B, T, hidden_size), jnp.float32)
    h0 = jax.random.normal(kh, (num_layers, B, hidden_dim), jnp.float32)
    c0 = jax.random.normal(kc, (num_layers, B, hidden_dim), jnp.float32)

    out, (h_n, c_n) = model(x, (h0, c0))
    jax.block_until_ready((out, h_n, c_n))

    ref_out, (ref_h, ref_c) = reference_forward(model, x, (h0, c0))
    assert out.shape == (B, T, output_size)
    assert h_n.shape == (num_layers, B, hidden_dim)
    assert c_n.shape == (num_layers, B, hidden_dim)

    # bf16 matmul operands + tanh-via-sigmoid rewrite: tolerance loosened vs pure f32.
    atol = 5e-3 if model.matmul_dtype == jnp.bfloat16 else 2e-4
    assert jnp.allclose(out, ref_out, atol=atol), "output mismatch"
    assert jnp.allclose(h_n, ref_h, atol=atol), "h_n mismatch"
    assert jnp.allclose(c_n, ref_c, atol=atol), "c_n mismatch"

    print("KERNEL_OK")
</pallas_src>

<mosaic_0001>
module attributes {stable_mosaic.version = 11 : i64} {
  func.func @kernel(%arg0: memref<16x32xbf16, #tpu.memory_space<vmem>>, %arg1: memref<2x2x32xf32, #tpu.memory_space<vmem>>, %arg2: memref<2x2x32xf32, #tpu.memory_space<vmem>>, %arg3: memref<32x128xbf16, #tpu.memory_space<vmem>>, %arg4: memref<32x128xbf16, #tpu.memory_space<vmem>>, %arg5: memref<1x128xf32, #tpu.memory_space<vmem>>, %arg6: memref<64x128xbf16, #tpu.memory_space<vmem>>, %arg7: memref<1x128xf32, #tpu.memory_space<vmem>>, %arg8: memref<32x128xbf16, #tpu.memory_space<vmem>>, %arg9: memref<1x128xf32, #tpu.memory_space<vmem>>, %arg10: memref<16x128xf32, #tpu.memory_space<vmem>>, %arg11: memref<2x2x32xf32, #tpu.memory_space<vmem>>, %arg12: memref<2x2x32xf32, #tpu.memory_space<vmem>>) attributes {dimension_semantics = [], scalar_prefetch = 0 : i64, scratch_operands = 0 : i64, tpu.core_type = #tpu.core_type<tc>} {
    %c0 = arith.constant 0 : index
    %c0_0 = arith.constant 0 : index
    %0 = vector.load %arg4[%c0, %c0_0] : memref<32x128xbf16, #tpu.memory_space<vmem>>, vector<32x128xbf16>
    %c0_1 = arith.constant 0 : index
    %c0_2 = arith.constant 0 : index
    %1 = vector.load %arg6[%c0_1, %c0_2] : memref<64x128xbf16, #tpu.memory_space<vmem>>, vector<64x128xbf16>
    %c0_3 = arith.constant 0 : index
    %c0_4 = arith.constant 0 : index
    %2 = vector.load %arg7[%c0_3, %c0_4] : memref<1x128xf32, #tpu.memory_space<vmem>>, vector<1x128xf32>
    %c0_5 = arith.constant 0 : index
    %c0_6 = arith.constant 0 : index
    %3 = vector.load %arg0[%c0_5, %c0_6] : memref<16x32xbf16, #tpu.memory_space<vmem>>, vector<16x32xbf16>
    %c0_7 = arith.constant 0 : index
    %c0_8 = arith.constant 0 : index
    %4 = vector.load %arg3[%c0_7, %c0_8] : memref<32x128xbf16, #tpu.memory_space<vmem>>, vector<32x128xbf16>
    %cst = arith.constant dense<0.000000e+00> : vector<16x128xf32>
    %5 = tpu.matmul %3, %4, %cst {dimension_numbers = #tpu.dot_dimension_numbers<[1], [0], [0], [1], [0, 0, 1, 1], [], []>} : vector<16x32xbf16>, vector<32x128xbf16>, vector<16x128xf32> -> vector<16x128xf32>
    %c0_9 = arith.constant 0 : index
    %c0_10 = arith.constant 0 : index
    %6 = vector.load %arg5[%c0_9, %c0_10] : memref<1x128xf32, #tpu.memory_space<vmem>>, vector<1x128xf32>
    %7 = vector.broadcast %6 : vector<1x128xf32> to vector<16x128xf32>
    %8 = arith.addf %5, %7 : vector<16x128xf32>
    %c0_11 = arith.constant 0 : index
    %c0_12 = arith.constant 0 : index
    %c0_13 = arith.constant 0 : index
    %9 = vector.load %arg1[%c0_11, %c0_12, %c0_13] : memref<2x2x32xf32, #tpu.memory_space<vmem>>, vector<1x2x32xf32>
    %10 = vector.shape_cast %9 : vector<1x2x32xf32> to vector<2x32xf32>
    %c1 = arith.constant 1 : index
    %c0_14 = arith.constant 0 : index
    %c0_15 = arith.constant 0 : index
    %11 = vector.load %arg1[%c1, %c0_14, %c0_15] : memref<2x2x32xf32, #tpu.memory_space<vmem>>, vector<1x2x32xf32>
    %12 = vector.shape_cast %11 : vector<1x2x32xf32> to vector<2x32xf32>
    %c0_16 = arith.constant 0 : index
    %c0_17 = arith.constant 0 : index
    %c0_18 = arith.constant 0 : index
    %13 = vector.load %arg2[%c0_16, %c0_17, %c0_18] : memref<2x2x32xf32, #tpu.memory_space<vmem>>, vector<1x2x32xf32>
    %14 = vector.shape_cast %13 : vector<1x2x32xf32> to vector<2x32xf32>
    %c1_19 = arith.constant 1 : index
    %c0_20 = arith.constant 0 : index
    %c0_21 = arith.constant 0 : index
    %15 = vector.load %arg2[%c1_19, %c0_20, %c0_21] : memref<2x2x32xf32, #tpu.memory_space<vmem>>, vector<1x2x32xf32>
    %16 = vector.shape_cast %15 : vector<1x2x32xf32> to vector<2x32xf32>
    %17 = vector.extract_strided_slice %8 {offsets = [0, 0], sizes = [2, 128], strides = [1, 1]} : vector<16x128xf32> to vector<2x128xf32>
    %18 = arith.truncf %10 : vector<2x32xf32> to vector<2x32xbf16>
    %cst_22 = arith.constant dense<0.000000e+00> : vector<2x128xf32>
    %19 = tpu.matmul %18, %0, %cst_22 {dimension_numbers = #tpu.dot_dimension_numbers<[1], [0], [0], [1], [0, 0, 1, 1], [], []>} : vector<2x32xbf16>, vector<32x128xbf16>, vector<2x128xf32> -> vector<2x128xf32>
    %20 = arith.addf %17, %19 : vector<2x128xf32>
    %21 = arith.negf %20 : vector<2x128xf32>
    %22 = math.exp %21 : vector<2x128xf32>
    %cst_23 = arith.constant 1.000000e+00 : f32
    %23 = vector.broadcast %cst_23 : f32 to vector<2x128xf32>
    %24 = arith.addf %23, %22 : vector<2x128xf32>
    %25 = arith.divf %23, %24 : vector<2x128xf32>
    %26 = vector.extract_strided_slice %25 {offsets = [0, 0], sizes = [2, 32], strides = [1, 1]} : vector<2x128xf32> to vector<2x32xf32>
    %27 = vector.extract_strided_slice %25 {offsets = [0, 32], sizes = [2, 32], strides = [1, 1]} : vector<2x128xf32> to vector<2x32xf32>
    %28 = vector.extract_strided_slice %25 {offsets = [0, 64], sizes = [2, 32], strides = [1, 1]} : vector<2x128xf32> to vector<2x32xf32>
    %cst_24 = arith.constant 2.000000e+00 : f32
    %29 = vector.broadcast %cst_24 : f32 to vector<2x32xf32>
    %30 = arith.mulf %29, %28 : vector<2x32xf32>
    %cst_25 = arith.constant 1.000000e+00 : f32
    %31 = vector.broadcast %cst_25 : f32 to vector<2x32xf32>
    %32 = arith.subf %30, %31 : vector<2x32xf32>
    %33 = vector.extract_strided_slice %25 {offsets = [0, 96], sizes = [2, 32], strides = [1, 1]} : vector<2x128xf32> to vector<2x32xf32>
    %34 = arith.mulf %27, %14 : vector<2x32xf32>
    %35 = arith.mulf %26, %32 : vector<2x32xf32>
    %36 = arith.addf %34, %35 : vector<2x32xf32>
    %37 = math.tanh %36 : vector<2x32xf32>
    %38 = arith.mulf %33, %37 : vector<2x32xf32>
    %39 = vector.extract_strided_slice %8 {offsets = [2, 0], sizes = [2, 128], strides = [1, 1]} : vector<16x128xf32> to vector<2x128xf32>
    %40 = arith.truncf %38 : vector<2x32xf32> to vector<2x32xbf16>
    %cst_26 = arith.constant dense<0.000000e+00> : vector<2x128xf32>
    %41 = tpu.matmul %40, %0, %cst_26 {dimension_numbers = #tpu.dot_dimension_numbers<[1], [0], [0], [1], [0, 0, 1, 1], [], []>} : vector<2x32xbf16>, vector<32x128xbf16>, vector<2x128xf32> -> vector<2x128xf32>
    %42 = arith.addf %39, %41 : vector<2x128xf32>
    %43 = arith.negf %42 : vector<2x128xf32>
    %44 = math.exp %43 : vector<2x128xf32>
    %cst_27 = arith.constant 1.000000e+00 : f32
    %45 = vector.broadcast %cst_27 : f32 to vector<2x128xf32>
    %46 = arith.addf %45, %44 : vector<2x128xf32>
    %47 = arith.divf %45, %46 : vector<2x128xf32>
    %48 = vector.extract_strided_slice %47 {offsets = [0, 0], sizes = [2, 32], strides = [1, 1]} : vector<2x128xf32> to vector<2x32xf32>
    %49 = vector.extract_strided_slice %47 {offsets = [0, 32], sizes = [2, 32], strides = [1, 1]} : vector<2x128xf32> to vector<2x32xf32>
    %50 = vector.extract_strided_slice %47 {offsets = [0, 64], sizes = [2, 32], strides = [1, 1]} : vector<2x128xf32> to vector<2x32xf32>
    %cst_28 = arith.constant 2.000000e+00 : f32
    %51 = vector.broadcast %cst_28 : f32 to vector<2x32xf32>
    %52 = arith.mulf %51, %50 : vector<2x32xf32>
    %cst_29 = arith.constant 1.000000e+00 : f32
    %53 = vector.broadcast %cst_29 : f32 to vector<2x32xf32>
    %54 = arith.subf %52, %53 : vector<2x32xf32>
    %55 = vector.extract_strided_slice %47 {offsets = [0, 96], sizes = [2, 32], strides = [1, 1]} : vector<2x128xf32> to vector<2x32xf32>
    %56 = arith.mulf %49, %36 : vector<2x32xf32>
    %57 = arith.mulf %48, %54 : vector<2x32xf32>
    %58 = arith.addf %56, %57 : vector<2x32xf32>
    %59 = math.tanh %58 : vector<2x32xf32>
    %60 = arith.mulf %55, %59 : vector<2x32xf32>
    %61 = tpu.concatenate %38, %12 in 1 : vector<2x32xf32>, vector<2x32xf32> -> vector<2x64xf32>
    %62 = arith.truncf %61 : vector<2x64xf32> to vector<2x64xbf16>
    %cst_30 = arith.constant dense<0.000000e+00> : vector<2x128xf32>
    %63 = tpu.matmul %62, %1, %cst_30 {dimension_numbers = #tpu.dot_dimension_numbers<[1], [0], [0], [1], [0, 0, 1, 1], [], []>} : vector<2x64xbf16>, vector<64x128xbf16>, vector<2x128xf32> -> vector<2x128xf32>
    %64 = vector.broadcast %2 : vector<1x128xf32> to vector<2x128xf32>
    %65 = arith.addf %63, %64 : vector<2x128xf32>
    %66 = arith.negf %65 : vector<2x128xf32>
    %67 = math.exp %66 : vector<2x128xf32>
    %cst_31 = arith.constant 1.000000e+00 : f32
    %68 = vector.broadcast %cst_31 : f32 to vector<2x128xf32>
    %69 = arith.addf %68, %67 : vector<2x128xf32>
    %70 = arith.divf %68, %69 : vector<2x128xf32>
    %71 = vector.extract_strided_slice %70 {offsets = [0, 0], sizes = [2, 32], strides = [1, 1]} : vector<2x128xf32> to vector<2x32xf32>
    %72 = vector.extract_strided_slice %70 {offsets = [0, 32], sizes = [2, 32], strides = [1, 1]} : vector<2x128xf32> to vector<2x32xf32>
    %73 = vector.extract_strided_slice %70 {offsets = [0, 64], sizes = [2, 32], strides = [1, 1]} : vector<2x128xf32> to vector<2x32xf32>
    %cst_32 = arith.constant 2.000000e+00 : f32
    %74 = vector.broadcast %cst_32 : f32 to vector<2x32xf32>
    %75 = arith.mulf %74, %73 : vector<2x32xf32>
    %cst_33 = arith.constant 1.000000e+00 : f32
    %76 = vector.broadcast %cst_33 : f32 to vector<2x32xf32>
    %77 = arith.subf %75, %76 : vector<2x32xf32>
    %78 = vector.extract_strided_slice %70 {offsets = [0, 96], sizes = [2, 32], strides = [1, 1]} : vector<2x128xf32> to vector<2x32xf32>
    %79 = arith.mulf %72, %16 : vector<2x32xf32>
    %80 = arith.mulf %71, %77 : vector<2x32xf32>
    %81 = arith.addf %79, %80 : vector<2x32xf32>
    %82 = math.tanh %81 : vector<2x32xf32>
    %83 = arith.mulf %78, %82 : vector<2x32xf32>
    %84 = vector.extract_strided_slice %8 {offsets = [4, 0], sizes = [2, 128], strides = [1, 1]} : vector<16x128xf32> to vector<2x128xf32>
    %85 = arith.truncf %60 : vector<2x32xf32> to vector<2x32xbf16>
    %cst_34 = arith.constant dense<0.000000e+00> : vector<2x128xf32>
    %86 = tpu.matmul %85, %0, %cst_34 {dimension_numbers = #tpu.dot_dimension_numbers<[1], [0], [0], [1], [0, 0, 1, 1], [], []>} : vector<2x32xbf16>, vector<32x128xbf16>, vector<2x128xf32> -> vector<2x128xf32>
    %87 = arith.addf %84, %86 : vector<2x128xf32>
    %88 = arith.negf %87 : vector<2x128xf32>
    %89 = math.exp %88 : vector<2x128xf32>
    %cst_35 = arith.constant 1.000000e+00 : f32
    %90 = vector.broadcast %cst_35 : f32 to vector<2x128xf32>
    %91 = arith.addf %90, %89 : vector<2x128xf32>
    %92 = arith.divf %90, %91 : vector<2x128xf32>
    %93 = vector.extract_strided_slice %92 {offsets = [0, 0], sizes = [2, 32], strides = [1, 1]} : vector<2x128xf32> to vector<2x32xf32>
    %94 = vector.extract_strided_slice %92 {offsets = [0, 32], sizes = [2, 32], strides = [1, 1]} : vector<2x128xf32> to vector<2x32xf32>
    %95 = vector.extract_strided_slice %92 {offsets = [0, 64], sizes = [2, 32], strides = [1, 1]} : vector<2x128xf32> to vector<2x32xf32>
    %cst_36 = arith.constant 2.000000e+00 : f32
    %96 = vector.broadcast %cst_36 : f32 to vector<2x32xf32>
    %97 = arith.mulf %96, %95 : vector<2x32xf32>
    %cst_37 = arith.constant 1.000000e+00 : f32
    %98 = vector.broadcast %cst_37 : f32 to vector<2x32xf32>
    %99 = arith.subf %97, %98 : vector<2x32xf32>
    %100 = vector.extract_strided_slice %92 {offsets = [0, 96], sizes = [2, 32], strides = [1, 1]} : vector<2x128xf32> to vector<2x32xf32>
    %101 = arith.mulf %94, %58 : vector<2x32xf32>
    %102 = arith.mulf %93, %99 : vector<2x32xf32>
    %103 = arith.addf %101, %102 : vector<2x32xf32>
    %104 = math.tanh %103 : vector<2x32xf32>
    %105 = arith.mulf %100, %104 : vector<2x32xf32>
    %106 = tpu.concatenate %60, %83 in 1 : vector<2x32xf32>, vector<2x32xf32> -> vector<2x64xf32>
    %107 = arith.truncf %106 : vector<2x64xf32> to vector<2x64xbf16>
    %cst_38 = arith.constant dense<0.000000e+00> : vector<2x128xf32>
    %108 = tpu.matmul %107, %1, %cst_38 {dimension_numbers = #tpu.dot_dimension_numbers<[1], [0], [0], [1], [0, 0, 1, 1], [], []>} : vector<2x64xbf16>, vector<64x128xbf16>, vector<2x128xf32> -> vector<2x128xf32>
    %109 = vector.broadcast %2 : vector<1x128xf32> to vector<2x128xf32>
    %110 = arith.addf %108, %109 : vector<2x128xf32>
    %111 = arith.negf %110 : vector<2x128xf32>
    %112 = math.exp %111 : vector<2x128xf32>
    %cst_39 = arith.constant 1.000000e+00 : f32
    %113 = vector.broadcast %cst_39 : f32 to vector<2x128xf32>
    %114 = arith.addf %113, %112 : vector<2x128xf32>
    %115 = arith.divf %113, %114 : vector<2x128xf32>
    %116 = vector.extract_strided_slice %115 {offsets = [0, 0], sizes = [2, 32], strides = [1, 1]} : vector<2x128xf32> to vector<2x32xf32>
    %117 = vector.extract_strided_slice %115 {offsets = [0, 32], sizes = [2, 32], strides = [1, 1]} : vector<2x128xf32> to vector<2x32xf32>
    %118 = vector.extract_strided_slice %115 {offsets = [0, 64], sizes = [2, 32], strides = [1, 1]} : vector<2x128xf32> to vector<2x32xf32>
    %cst_40 = arith.constant 2.000000e+00 : f32
    %119 = vector.broadcast %cst_40 : f32 to vector<2x32xf32>
    %120 = arith.mulf %119, %118 : vector<2x32xf32>
    %cst_41 = arith.constant 1.000000e+00 : f32
    %121 = vector.broadcast %cst_41 : f32 to vector<2x32xf32>
    %122 = arith.subf %120, %121 : vector<2x32xf32>
    %123 = vector.extract_strided_slice %115 {offsets = [0, 96], sizes = [2, 32], strides = [1, 1]} : vector<2x128xf32> to vector<2x32xf32>
    %124 = arith.mulf %117, %81 : vector<2x32xf32>
    %125 = arith.mulf %116, %122 : vector<2x32xf32>
    %126 = arith.addf %124, %125 : vector<2x32xf32>
    %127 = math.tanh %126 : vector<2x32xf32>
    %128 = arith.mulf %123, %127 : vector<2x32xf32>
    %129 = vector.extract_strided_slice %8 {offsets = [6, 0], sizes = [2, 128], strides = [1, 1]} : vector<16x128xf32> to vector<2x128xf32>
    %130 = arith.truncf %105 : vector<2x32xf32> to vector<2x32xbf16>
    %cst_42 = arith.constant dense<0.000000e+00> : vector<2x128xf32>
    %131 = tpu.matmul %130, %0, %cst_42 {dimension_numbers = #tpu.dot_dimension_numbers<[1], [0], [0], [1], [0, 0, 1, 1], [], []>} : vector<2x32xbf16>, vector<32x128xbf16>, vector<2x128xf32> -> vector<2x128xf32>
    %132 = arith.addf %129, %131 : vector<2x128xf32>
    %133 = arith.negf %132 : vector<2x128xf32>
    %134 = math.exp %133 : vector<2x128xf32>
    %cst_43 = arith.constant 1.000000e+00 : f32
    %135 = vector.broadcast %cst_43 : f32 to vector<2x128xf32>
    %136 = arith.addf %135, %134 : vector<2x128xf32>
    %137 = arith.divf %135, %136 : vector<2x128xf32>
    %138 = vector.extract_strided_slice %137 {offsets = [0, 0], sizes = [2, 32], strides = [1, 1]} : vector<2x128xf32> to vector<2x32xf32>
    %139 = vector.extract_strided_slice %137 {offsets = [0, 32], sizes = [2, 32], strides = [1, 1]} : vector<2x128xf32> to vector<2x32xf32>
    %140 = vector.extract_strided_slice %137 {offsets = [0, 64], sizes = [2, 32], strides = [1, 1]} : vector<2x128xf32> to vector<2x32xf32>
    %cst_44 = arith.constant 2.000000e+00 : f32
    %141 = vector.broadcast %cst_44 : f32 to vector<2x32xf32>
    %142 = arith.mulf %141, %140 : vector<2x32xf32>
    %cst_45 = arith.constant 1.000000e+00 : f32
    %143 = vector.broadcast %cst_45 : f32 to vector<2x32xf32>
    %144 = arith.subf %142, %143 : vector<2x32xf32>
    %145 = vector.extract_strided_slice %137 {offsets = [0, 96], sizes = [2, 32], strides = [1, 1]} : vector<2x128xf32> to vector<2x32xf32>
    %146 = arith.mulf %139, %103 : vector<2x32xf32>
    %147 = arith.mulf %138, %144 : vector<2x32xf32>
    %148 = arith.addf %146, %147 : vector<2x32xf32>
    %149 = math.tanh %148 : vector<2x32xf32>
    %150 = arith.mulf %145, %149 : vector<2x32xf32>
    %151 = tpu.concatenate %105, %128 in 1 : vector<2x32xf32>, vector<2x32xf32> -> vector<2x64xf32>
    %152 = arith.truncf %151 : vector<2x64xf32> to vector<2x64xbf16>
    %cst_46 = arith.constant dense<0.000000e+00> : vector<2x128xf32>
    %153 = tpu.matmul %152, %1, %cst_46 {dimension_numbers = #tpu.dot_dimension_numbers<[1], [0], [0], [1], [0, 0, 1, 1], [], []>} : vector<2x64xbf16>, vector<64x128xbf16>, vector<2x128xf32> -> vector<2x128xf32>
    %154 = vector.broadcast %2 : vector<1x128xf32> to vector<2x128xf32>
    %155 = arith.addf %153, %154 : vector<2x128xf32>
    %156 = arith.negf %155 : vector<2x128xf32>
    %157 = math.exp %156 : vector<2x128xf32>
    %cst_47 = arith.constant 1.000000e+00 : f32
    %158 = vector.broadcast %cst_47 : f32 to vector<2x128xf32>
    %159 = arith.addf %158, %157 : vector<2x128xf32>
    %160 = arith.divf %158, %159 : vector<2x128xf32>
    %161 = vector.extract_strided_slice %160 {offsets = [0, 0], sizes = [2, 32], strides = [1, 1]} : vector<2x128xf32> to vector<2x32xf32>
    %162 = vector.extract_strided_slice %160 {offsets = [0, 32], sizes = [2, 32], strides = [1, 1]} : vector<2x128xf32> to vector<2x32xf32>
    %163 = vector.extract_strided_slice %160 {offsets = [0, 64], sizes = [2, 32], strides = [1, 1]} : vector<2x128xf32> to vector<2x32xf32>
    %cst_48 = arith.constant 2.000000e+00 : f32
    %164 = vector.broadcast %cst_48 : f32 to vector<2x32xf32>
    %165 = arith.mulf %164, %163 : vector<2x32xf32>
    %cst_49 = arith.constant 1.000000e+00 : f32
    %166 = vector.broadcast %cst_49 : f32 to vector<2x32xf32>
    %167 = arith.subf %165, %166 : vector<2x32xf32>
    %168 = vector.extract_strided_slice %160 {offsets = [0, 96], sizes = [2, 32], strides = [1, 1]} : vector<2x128xf32> to vector<2x32xf32>
    %169 = arith.mulf %162, %126 : vector<2x32xf32>
    %170 = arith.mulf %161, %167 : vector<2x32xf32>
    %171 = arith.addf %169, %170 : vector<2x32xf32>
    %172 = math.tanh %171 : vector<2x32xf32>
    %173 = arith.mulf %168, %172 : vector<2x32xf32>
    %174 = vector.extract_strided_slice %8 {offsets = [8, 0], sizes = [2, 128], strides = [1, 1]} : vector<16x128xf32> to vector<2x128xf32>
    %175 = arith.truncf %150 : vector<2x32xf32> to vector<2x32xbf16>
    %cst_50 = arith.constant dense<0.000000e+00> : vector<2x128xf32>
    %176 = tpu.matmul %175, %0, %cst_50 {dimension_numbers = #tpu.dot_dimension_numbers<[1], [0], [0], [1], [0, 0, 1, 1], [], []>} : vector<2x32xbf16>, vector<32x128xbf16>, vector<2x128xf32> -> vector<2x128xf32>
    %177 = arith.addf %174, %176 : vector<2x128xf32>
    %178 = arith.negf %177 : vector<2x128xf32>
    %179 = math.exp %178 : vector<2x128xf32>
    %cst_51 = arith.constant 1.000000e+00 : f32
    %180 = vector.broadcast %cst_51 : f32 to vector<2x128xf32>
    %181 = arith.addf %180, %179 : vector<2x128xf32>
    %182 = arith.divf %180, %181 : vector<2x128xf32>
    %183 = vector.extract_strided_slice %182 {offsets = [0, 0], sizes = [2, 32], strides = [1, 1]} : vector<2x128xf32> to vector<2x32xf32>
    %184 = vector.extract_strided_slice %182 {offsets = [0, 32], sizes = [2, 32], strides = [1, 1]} : vector<2x128xf32> to vector<2x32xf32>
    %185 = vector.extract_strided_slice %182 {offsets = [0, 64], sizes = [2, 32], strides = [1, 1]} : vector<2x128xf32> to vector<2x32xf32>
    %cst_52 = arith.constant 2.000000e+00 : f32
    %186 = vector.broadcast %cst_52 : f32 to vector<2x32xf32>
    %187 = arith.mulf %186, %185 : vector<2x32xf32>
    %cst_53 = arith.constant 1.000000e+00 : f32
    %188 = vector.broadcast %cst_53 : f32 to vector<2x32xf32>
    %189 = arith.subf %187, %188 : vector<2x32xf32>
    %190 = vector.extract_strided_slice %182 {offsets = [0, 96], sizes = [2, 32], strides = [1, 1]} : vector<2x128xf32> to vector<2x32xf32>
    %191 = arith.mulf %184, %148 : vector<2x32xf32>
    %192 = arith.mulf %183, %189 : vector<2x32xf32>
    %193 = arith.addf %191, %192 : vector<2x32xf32>
    %194 = math.tanh %193 : vector<2x32xf32>
    %195 = arith.mulf %190, %194 : vector<2x32xf32>
    %196 = tpu.concatenate %150, %173 in 1 : vector<2x32xf32>, vector<2x32xf32> -> vector<2x64xf32>
    %197 = arith.truncf %196 : vector<2x64xf32> to vector<2x64xbf16>
    %cst_54 = arith.constant dense<0.000000e+00> : vector<2x128xf32>
    %198 = tpu.matmul %197, %1, %cst_54 {dimension_numbers = #tpu.dot_dimension_numbers<[1], [0], [0], [1], [0, 0, 1, 1], [], []>} : vector<2x64xbf16>, vector<64x128xbf16>, vector<2x128xf32> -> vector<2x128xf32>
    %199 = vector.broadcast %2 : vector<1x128xf32> to vector<2x128xf32>
    %200 = arith.addf %198, %199 : vector<2x128xf32>
    %201 = arith.negf %200 : vector<2x128xf32>
    %202 = math.exp %201 : vector<2x128xf32>
    %cst_55 = arith.constant 1.000000e+00 : f32
    %203 = vector.broadcast %cst_55 : f32 to vector<2x128xf32>
    %204 = arith.addf %203, %202 : vector<2x128xf32>
    %205 = arith.divf %203, %204 : vector<2x128xf32>
    %206 = vector.extract_strided_slice %205 {offsets = [0, 0], sizes = [2, 32], strides = [1, 1]} : vector<2x128xf32> to vector<2x32xf32>
    %207 = vector.extract_strided_slice %205 {offsets = [0, 32], sizes = [2, 32], strides = [1, 1]} : vector<2x128xf32> to vector<2x32xf32>
    %208 = vector.extract_strided_slice %205 {offsets = [0, 64], sizes = [2, 32], strides = [1, 1]} : vector<2x128xf32> to vector<2x32xf32>
    %cst_56 = arith.constant 2.000000e+00 : f32
    %209 = vector.broadcast %cst_56 : f32 to vector<2x32xf32>
    %210 = arith.mulf %209, %208 : vector<2x32xf32>
    %cst_57 = arith.constant 1.000000e+00 : f32
    %211 = vector.broadcast %cst_57 : f32 to vector<2x32xf32>
    %212 = arith.subf %210, %211 : vector<2x32xf32>
    %213 = vector.extract_strided_slice %205 {offsets = [0, 96], sizes = [2, 32], strides = [1, 1]} : vector<2x128xf32> to vector<2x32xf32>
    %214 = arith.mulf %207, %171 : vector<2x32xf32>
    %215 = arith.mulf %206, %212 : vector<2x32xf32>
    %216 = arith.addf %214, %215 : vector<2x32xf32>
    %217 = math.tanh %216 : vector<2x32xf32>
    %218 = arith.mulf %213, %217 : vector<2x32xf32>
    %219 = vector.extract_strided_slice %8 {offsets = [10, 0], sizes = [2, 128], strides = [1, 1]} : vector<16x128xf32> to vector<2x128xf32>
    %220 = arith.truncf %195 : vector<2x32xf32> to vector<2x32xbf16>
    %cst_58 = arith.constant dense<0.000000e+00> : vector<2x128xf32>
    %221 = tpu.matmul %220, %0, %cst_58 {dimension_numbers = #tpu.dot_dimension_numbers<[1], [0], [0], [1], [0, 0, 1, 1], [], []>} : vector<2x32xbf16>, vector<32x128xbf16>, vector<2x128xf32> -> vector<2x128xf32>
    %222 = arith.addf %219, %221 : vector<2x128xf32>
    %223 = arith.negf %222 : vector<2x128xf32>
    %224 = math.exp %223 : vector<2x128xf32>
    %cst_59 = arith.constant 1.000000e+00 : f32
    %225 = vector.broadcast %cst_59 : f32 to vector<2x128xf32>
    %226 = arith.addf %225, %224 : vector<2x128xf32>
    %227 = arith.divf %225, %226 : vector<2x128xf32>
    %228 = vector.extract_strided_slice %227 {offsets = [0, 0], sizes = [2, 32], strides = [1, 1]} : vector<2x128xf32> to vector<2x32xf32>
    %229 = vector.extract_strided_slice %227 {offsets = [0, 32], sizes = [2, 32], strides = [1, 1]} : vector<2x128xf32> to vector<2x32xf32>
    %230 = vector.extract_strided_slice %227 {offsets = [0, 64], sizes = [2, 32], strides = [1, 1]} : vector<2x128xf32> to vector<2x32xf32>
    %cst_60 = arith.constant 2.000000e+00 : f32
    %231 = vector.broadcast %cst_60 : f32 to vector<2x32xf32>
    %232 = arith.mulf %231, %230 : vector<2x32xf32>
    %cst_61 = arith.constant 1.000000e+00 : f32
    %233 = vector.broadcast %cst_61 : f32 to vector<2x32xf32>
    %234 = arith.subf %232, %233 : vector<2x32xf32>
    %235 = vector.extract_strided_slice %227 {offsets = [0, 96], sizes = [2, 32], strides = [1, 1]} : vector<2x128xf32> to vector<2x32xf32>
    %236 = arith.mulf %229, %193 : vector<2x32xf32>
    %237 = arith.mulf %228, %234 : vector<2x32xf32>
    %238 = arith.addf %236, %237 : vector<2x32xf32>
    %239 = math.tanh %238 : vector<2x32xf32>
    %240 = arith.mulf %235, %239 : vector<2x32xf32>
    %241 = tpu.concatenate %195, %218 in 1 : vector<2x32xf32>, vector<2x32xf32> -> vector<2x64xf32>
    %242 = arith.truncf %241 : vector<2x64xf32> to vector<2x64xbf16>
    %cst_62 = arith.constant dense<0.000000e+00> : vector<2x128xf32>
    %243 = tpu.matmul %242, %1, %cst_62 {dimension_numbers = #tpu.dot_dimension_numbers<[1], [0], [0], [1], [0, 0, 1, 1], [], []>} : vector<2x64xbf16>, vector<64x128xbf16>, vector<2x128xf32> -> vector<2x128xf32>
    %244 = vector.broadcast %2 : vector<1x128xf32> to vector<2x128xf32>
    %245 = arith.addf %243, %244 : vector<2x128xf32>
    %246 = arith.negf %245 : vector<2x128xf32>
    %247 = math.exp %246 : vector<2x128xf32>
    %cst_63 = arith.constant 1.000000e+00 : f32
    %248 = vector.broadcast %cst_63 : f32 to vector<2x128xf32>
    %249 = arith.addf %248, %247 : vector<2x128xf32>
    %250 = arith.divf %248, %249 : vector<2x128xf32>
    %251 = vector.extract_strided_slice %250 {offsets = [0, 0], sizes = [2, 32], strides = [1, 1]} : vector<2x128xf32> to vector<2x32xf32>
    %252 = vector.extract_strided_slice %250 {offsets = [0, 32], sizes = [2, 32], strides = [1, 1]} : vector<2x128xf32> to vector<2x32xf32>
    %253 = vector.extract_strided_slice %250 {offsets = [0, 64], sizes = [2, 32], strides = [1, 1]} : vector<2x128xf32> to vector<2x32xf32>
    %cst_64 = arith.constant 2.000000e+00 : f32
    %254 = vector.broadcast %cst_64 : f32 to vector<2x32xf32>
    %255 = arith.mulf %254, %253 : vector<2x32xf32>
    %cst_65 = arith.constant 1.000000e+00 : f32
    %256 = vector.broadcast %cst_65 : f32 to vector<2x32xf32>
    %257 = arith.subf %255, %256 : vector<2x32xf32>
    %258 = vector.extract_strided_slice %250 {offsets = [0, 96], sizes = [2, 32], strides = [1, 1]} : vector<2x128xf32> to vector<2x32xf32>
    %259 = arith.mulf %252, %216 : vector<2x32xf32>
    %260 = arith.mulf %251, %257 : vector<2x32xf32>
    %261 = arith.addf %259, %260 : vector<2x32xf32>
    %262 = math.tanh %261 : vector<2x32xf32>
    %263 = arith.mulf %258, %262 : vector<2x32xf32>
    %264 = vector.extract_strided_slice %8 {offsets = [12, 0], sizes = [2, 128], strides = [1, 1]} : vector<16x128xf32> to vector<2x128xf32>
    %265 = arith.truncf %240 : vector<2x32xf32> to vector<2x32xbf16>
    %cst_66 = arith.constant dense<0.000000e+00> : vector<2x128xf32>
    %266 = tpu.matmul %265, %0, %cst_66 {dimension_numbers = #tpu.dot_dimension_numbers<[1], [0], [0], [1], [0, 0, 1, 1], [], []>} : vector<2x32xbf16>, vector<32x128xbf16>, vector<2x128xf32> -> vector<2x128xf32>
    %267 = arith.addf %264, %266 : vector<2x128xf32>
    %268 = arith.negf %267 : vector<2x128xf32>
    %269 = math.exp %268 : vector<2x128xf32>
    %cst_67 = arith.constant 1.000000e+00 : f32
    %270 = vector.broadcast %cst_67 : f32 to vector<2x128xf32>
    %271 = arith.addf %270, %269 : vector<2x128xf32>
    %272 = arith.divf %270, %271 : vector<2x128xf32>
    %273 = vector.extract_strided_slice %272 {offsets = [0, 0], sizes = [2, 32], strides = [1, 1]} : vector<2x128xf32> to vector<2x32xf32>
    %274 = vector.extract_strided_slice %272 {offsets = [0, 32], sizes = [2, 32], strides = [1, 1]} : vector<2x128xf32> to vector<2x32xf32>
    %275 = vector.extract_strided_slice %272 {offsets = [0, 64], sizes = [2, 32], strides = [1, 1]} : vector<2x128xf32> to vector<2x32xf32>
    %cst_68 = arith.constant 2.000000e+00 : f32
    %276 = vector.broadcast %cst_68 : f32 to vector<2x32xf32>
    %277 = arith.mulf %276, %275 : vector<2x32xf32>
    %cst_69 = arith.constant 1.000000e+00 : f32
    %278 = vector.broadcast %cst_69 : f32 to vector<2x32xf32>
    %279 = arith.subf %277, %278 : vector<2x32xf32>
    %280 = vector.extract_strided_slice %272 {offsets = [0, 96], sizes = [2, 32], strides = [1, 1]} : vector<2x128xf32> to vector<2x32xf32>
    %281 = arith.mulf %274, %238 : vector<2x32xf32>
    %282 = arith.mulf %273, %279 : vector<2x32xf32>
    %283 = arith.addf %281, %282 : vector<2x32xf32>
    %284 = math.tanh %283 : vector<2x32xf32>
    %285 = arith.mulf %280, %284 : vector<2x32xf32>
    %286 = tpu.concatenate %240, %263 in 1 : vector<2x32xf32>, vector<2x32xf32> -> vector<2x64xf32>
    %287 = arith.truncf %286 : vector<2x64xf32> to vector<2x64xbf16>
    %cst_70 = arith.constant dense<0.000000e+00> : vector<2x128xf32>
    %288 = tpu.matmul %287, %1, %cst_70 {dimension_numbers = #tpu.dot_dimension_numbers<[1], [0], [0], [1], [0, 0, 1, 1], [], []>} : vector<2x64xbf16>, vector<64x128xbf16>, vector<2x128xf32> -> vector<2x128xf32>
    %289 = vector.broadcast %2 : vector<1x128xf32> to vector<2x128xf32>
    %290 = arith.addf %288, %289 : vector<2x128xf32>
    %291 = arith.negf %290 : vector<2x128xf32>
    %292 = math.exp %291 : vector<2x128xf32>
    %cst_71 = arith.constant 1.000000e+00 : f32
    %293 = vector.broadcast %cst_71 : f32 to vector<2x128xf32>
    %294 = arith.addf %293, %292 : vector<2x128xf32>
    %295 = arith.divf %293, %294 : vector<2x128xf32>
    %296 = vector.extract_strided_slice %295 {offsets = [0, 0], sizes = [2, 32], strides = [1, 1]} : vector<2x128xf32> to vector<2x32xf32>
    %297 = vector.extract_strided_slice %295 {offsets = [0, 32], sizes = [2, 32], strides = [1, 1]} : vector<2x128xf32> to vector<2x32xf32>
    %298 = vector.extract_strided_slice %295 {offsets = [0, 64], sizes = [2, 32], strides = [1, 1]} : vector<2x128xf32> to vector<2x32xf32>
    %cst_72 = arith.constant 2.000000e+00 : f32
    %299 = vector.broadcast %cst_72 : f32 to vector<2x32xf32>
    %300 = arith.mulf %299, %298 : vector<2x32xf32>
    %cst_73 = arith.constant 1.000000e+00 : f32
    %301 = vector.broadcast %cst_73 : f32 to vector<2x32xf32>
    %302 = arith.subf %300, %301 : vector<2x32xf32>
    %303 = vector.extract_strided_slice %295 {offsets = [0, 96], sizes = [2, 32], strides = [1, 1]} : vector<2x128xf32> to vector<2x32xf32>
    %304 = arith.mulf %297, %261 : vector<2x32xf32>
    %305 = arith.mulf %296, %302 : vector<2x32xf32>
    %306 = arith.addf %304, %305 : vector<2x32xf32>
    %307 = math.tanh %306 : vector<2x32xf32>
    %308 = arith.mulf %303, %307 : vector<2x32xf32>
    %309 = vector.extract_strided_slice %8 {offsets = [14, 0], sizes = [2, 128], strides = [1, 1]} : vector<16x128xf32> to vector<2x128xf32>
    %310 = arith.truncf %285 : vector<2x32xf32> to vector<2x32xbf16>
    %cst_74 = arith.constant dense<0.000000e+00> : vector<2x128xf32>
    %311 = tpu.matmul %310, %0, %cst_74 {dimension_numbers = #tpu.dot_dimension_numbers<[1], [0], [0], [1], [0, 0, 1, 1], [], []>} : vector<2x32xbf16>, vector<32x128xbf16>, vector<2x128xf32> -> vector<2x128xf32>
    %312 = arith.addf %309, %311 : vector<2x128xf32>
    %313 = arith.negf %312 : vector<2x128xf32>
    %314 = math.exp %313 : vector<2x128xf32>
    %cst_75 = arith.constant 1.000000e+00 : f32
    %315 = vector.broadcast %cst_75 : f32 to vector<2x128xf32>
    %316 = arith.addf %315, %314 : vector<2x128xf32>
    %317 = arith.divf %315, %316 : vector<2x128xf32>
    %318 = vector.extract_strided_slice %317 {offsets = [0, 0], sizes = [2, 32], strides = [1, 1]} : vector<2x128xf32> to vector<2x32xf32>
    %319 = vector.extract_strided_slice %317 {offsets = [0, 32], sizes = [2, 32], strides = [1, 1]} : vector<2x128xf32> to vector<2x32xf32>
    %320 = vector.extract_strided_slice %317 {offsets = [0, 64], sizes = [2, 32], strides = [1, 1]} : vector<2x128xf32> to vector<2x32xf32>
    %cst_76 = arith.constant 2.000000e+00 : f32
    %321 = vector.broadcast %cst_76 : f32 to vector<2x32xf32>
    %322 = arith.mulf %321, %320 : vector<2x32xf32>
    %cst_77 = arith.constant 1.000000e+00 : f32
    %323 = vector.broadcast %cst_77 : f32 to vector<2x32xf32>
    %324 = arith.subf %322, %323 : vector<2x32xf32>
    %325 = vector.extract_strided_slice %317 {offsets = [0, 96], sizes = [2, 32], strides = [1, 1]} : vector<2x128xf32> to vector<2x32xf32>
    %326 = arith.mulf %319, %283 : vector<2x32xf32>
    %327 = arith.mulf %318, %324 : vector<2x32xf32>
    %328 = arith.addf %326, %327 : vector<2x32xf32>
    %329 = math.tanh %328 : vector<2x32xf32>
    %330 = arith.mulf %325, %329 : vector<2x32xf32>
    %331 = tpu.concatenate %285, %308 in 1 : vector<2x32xf32>, vector<2x32xf32> -> vector<2x64xf32>
    %332 = arith.truncf %331 : vector<2x64xf32> to vector<2x64xbf16>
    %cst_78 = arith.constant dense<0.000000e+00> : vector<2x128xf32>
    %333 = tpu.matmul %332, %1, %cst_78 {dimension_numbers = #tpu.dot_dimension_numbers<[1], [0], [0], [1], [0, 0, 1, 1], [], []>} : vector<2x64xbf16>, vector<64x128xbf16>, vector<2x128xf32> -> vector<2x128xf32>
    %334 = vector.broadcast %2 : vector<1x128xf32> to vector<2x128xf32>
    %335 = arith.addf %333, %334 : vector<2x128xf32>
    %336 = arith.negf %335 : vector<2x128xf32>
    %337 = math.exp %336 : vector<2x128xf32>
    %cst_79 = arith.constant 1.000000e+00 : f32
    %338 = vector.broadcast %cst_79 : f32 to vector<2x128xf32>
    %339 = arith.addf %338, %337 : vector<2x128xf32>
    %340 = arith.divf %338, %339 : vector<2x128xf32>
    %341 = vector.extract_strided_slice %340 {offsets = [0, 0], sizes = [2, 32], strides = [1, 1]} : vector<2x128xf32> to vector<2x32xf32>
    %342 = vector.extract_strided_slice %340 {offsets = [0, 32], sizes = [2, 32], strides = [1, 1]} : vector<2x128xf32> to vector<2x32xf32>
    %343 = vector.extract_strided_slice %340 {offsets = [0, 64], sizes = [2, 32], strides = [1, 1]} : vector<2x128xf32> to vector<2x32xf32>
    %cst_80 = arith.constant 2.000000e+00 : f32
    %344 = vector.broadcast %cst_80 : f32 to vector<2x32xf32>
    %345 = arith.mulf %344, %343 : vector<2x32xf32>
    %cst_81 = arith.constant 1.000000e+00 : f32
    %346 = vector.broadcast %cst_81 : f32 to vector<2x32xf32>
    %347 = arith.subf %345, %346 : vector<2x32xf32>
    %348 = vector.extract_strided_slice %340 {offsets = [0, 96], sizes = [2, 32], strides = [1, 1]} : vector<2x128xf32> to vector<2x32xf32>
    %349 = arith.mulf %342, %306 : vector<2x32xf32>
    %350 = arith.mulf %341, %347 : vector<2x32xf32>
    %351 = arith.addf %349, %350 : vector<2x32xf32>
    %352 = math.tanh %351 : vector<2x32xf32>
    %353 = arith.mulf %348, %352 : vector<2x32xf32>
    %354 = tpu.concatenate %330, %353 in 1 : vector<2x32xf32>, vector<2x32xf32> -> vector<2x64xf32>
    %355 = arith.truncf %354 : vector<2x64xf32> to vector<2x64xbf16>
    %cst_82 = arith.constant dense<0.000000e+00> : vector<2x128xf32>
    %356 = tpu.matmul %355, %1, %cst_82 {dimension_numbers = #tpu.dot_dimension_numbers<[1], [0], [0], [1], [0, 0, 1, 1], [], []>} : vector<2x64xbf16>, vector<64x128xbf16>, vector<2x128xf32> -> vector<2x128xf32>
    %357 = vector.broadcast %2 : vector<1x128xf32> to vector<2x128xf32>
    %358 = arith.addf %356, %357 : vector<2x128xf32>
    %359 = arith.negf %358 : vector<2x128xf32>
    %360 = math.exp %359 : vector<2x128xf32>
    %cst_83 = arith.constant 1.000000e+00 : f32
    %361 = vector.broadcast %cst_83 : f32 to vector<2x128xf32>
    %362 = arith.addf %361, %360 : vector<2x128xf32>
    %363 = arith.divf %361, %362 : vector<2x128xf32>
    %364 = vector.extract_strided_slice %363 {offsets = [0, 0], sizes = [2, 32], strides = [1, 1]} : vector<2x128xf32> to vector<2x32xf32>
    %365 = vector.extract_strided_slice %363 {offsets = [0, 32], sizes = [2, 32], strides = [1, 1]} : vector<2x128xf32> to vector<2x32xf32>
    %366 = vector.extract_strided_slice %363 {offsets = [0, 64], sizes = [2, 32], strides = [1, 1]} : vector<2x128xf32> to vector<2x32xf32>
    %cst_84 = arith.constant 2.000000e+00 : f32
    %367 = vector.broadcast %cst_84 : f32 to vector<2x32xf32>
    %368 = arith.mulf %367, %366 : vector<2x32xf32>
    %cst_85 = arith.constant 1.000000e+00 : f32
    %369 = vector.broadcast %cst_85 : f32 to vector<2x32xf32>
    %370 = arith.subf %368, %369 : vector<2x32xf32>
    %371 = vector.extract_strided_slice %363 {offsets = [0, 96], sizes = [2, 32], strides = [1, 1]} : vector<2x128xf32> to vector<2x32xf32>
    %372 = arith.mulf %365, %351 : vector<2x32xf32>
    %373 = arith.mulf %364, %370 : vector<2x32xf32>
    %374 = arith.addf %372, %373 : vector<2x32xf32>
    %375 = math.tanh %374 : vector<2x32xf32>
    %376 = arith.mulf %371, %375 : vector<2x32xf32>
    %c0_86 = arith.constant 0 : index
    %c0_87 = arith.constant 0 : index
    %c0_88 = arith.constant 0 : index
    %377 = vector.load %arg11[%c0_86, %c0_87, %c0_88] : memref<2x2x32xf32, #tpu.memory_space<vmem>>, vector<1x2x32xf32>
    %378 = vector.shape_cast %377 : vector<1x2x32xf32> to vector<2x32xf32>
    %379 = vector.shape_cast %330 : vector<2x32xf32> to vector<1x2x32xf32>
    tpu.vector_store %arg11[%c0_86, %c0_87, %c0_88], %379 {strides = array<i32>} : memref<2x2x32xf32, #tpu.memory_space<vmem>>, vector<1x2x32xf32>,
    %c0_89 = arith.constant 0 : index
    %c0_90 = arith.constant 0 : index
    %c0_91 = arith.constant 0 : index
    %380 = vector.load %arg12[%c0_89, %c0_90, %c0_91] : memref<2x2x32xf32, #tpu.memory_space<vmem>>, vector<1x2x32xf32>
    %381 = vector.shape_cast %380 : vector<1x2x32xf32> to vector<2x32xf32>
    %382 = vector.shape_cast %328 : vector<2x32xf32> to vector<1x2x32xf32>
    tpu.vector_store %arg12[%c0_89, %c0_90, %c0_91], %382 {strides = array<i32>} : memref<2x2x32xf32, #tpu.memory_space<vmem>>, vector<1x2x32xf32>,
    %c1_92 = arith.constant 1 : index
    %c0_93 = arith.constant 0 : index
    %c0_94 = arith.constant 0 : index
    %383 = vector.load %arg11[%c1_92, %c0_93, %c0_94] : memref<2x2x32xf32, #tpu.memory_space<vmem>>, vector<1x2x32xf32>
    %384 = vector.shape_cast %383 : vector<1x2x32xf32> to vector<2x32xf32>
    %385 = vector.shape_cast %376 : vector<2x32xf32> to vector<1x2x32xf32>
    tpu.vector_store %arg11[%c1_92, %c0_93, %c0_94], %385 {strides = array<i32>} : memref<2x2x32xf32, #tpu.memory_space<vmem>>, vector<1x2x32xf32>,
    %c1_95 = arith.constant 1 : index
    %c0_96 = arith.constant 0 : index
    %c0_97 = arith.constant 0 : index
    %386 = vector.load %arg12[%c1_95, %c0_96, %c0_97] : memref<2x2x32xf32, #tpu.memory_space<vmem>>, vector<1x2x32xf32>
    %387 = vector.shape_cast %386 : vector<1x2x32xf32> to vector<2x32xf32>
    %388 = vector.shape_cast %374 : vector<2x32xf32> to vector<1x2x32xf32>
    tpu.vector_store %arg12[%c1_95, %c0_96, %c0_97], %388 {strides = array<i32>} : memref<2x2x32xf32, #tpu.memory_space<vmem>>, vector<1x2x32xf32>,
    %389 = tpu.concatenate %83, %128, %173, %218, %263, %308, %353, %376 in 0 : vector<2x32xf32>, vector<2x32xf32>, vector<2x32xf32>, vector<2x32xf32>, vector<2x32xf32>, vector<2x32xf32>, vector<2x32xf32>, vector<2x32xf32> -> vector<16x32xf32>
    %390 = arith.truncf %389 : vector<16x32xf32> to vector<16x32xbf16>
    %c0_98 = arith.constant 0 : index
    %c0_99 = arith.constant 0 : index
    %391 = vector.load %arg8[%c0_98, %c0_99] : memref<32x128xbf16, #tpu.memory_space<vmem>>, vector<32x128xbf16>
    %cst_100 = arith.constant dense<0.000000e+00> : vector<16x128xf32>
    %392 = tpu.matmul %390, %391, %cst_100 {dimension_numbers = #tpu.dot_dimension_numbers<[1], [0], [0], [1], [0, 0, 1, 1], [], []>} : vector<16x32xbf16>, vector<32x128xbf16>, vector<16x128xf32> -> vector<16x128xf32>
    %c0_101 = arith.constant 0 : index
    %c0_102 = arith.constant 0 : index
    %393 = vector.load %arg9[%c0_101, %c0_102] : memref<1x128xf32, #tpu.memory_space<vmem>>, vector<1x128xf32>
    %394 = vector.broadcast %393 : vector<1x128xf32> to vector<16x128xf32>
    %395 = arith.addf %392, %394 : vector<16x128xf32>
    %c0_103 = arith.constant 0 : index
    %c0_104 = arith.constant 0 : index
    %396 = vector.load %arg10[%c0_103, %c0_104] : memref<16x128xf32, #tpu.memory_space<vmem>>, vector<16x128xf32>
    tpu.vector_store %arg10[%c0_103, %c0_104], %395 {strides = array<i32>} : memref<16x128xf32, #tpu.memory_space<vmem>>, vector<16x128xf32>,
    return
  }
}

</mosaic_0001>

<llo_original>
// kernel: tpu_custom_call.1
$region0: #{tpu_custom_call.1}
  #allocation0 [shape = 'u32[]', space=smem, size = 0x4, offset = 0x4, fixed_abs, tag = 'smem constant byte address 0x4 - core index']
  #allocation1 [shape = 'u32[144,128]{1,0:T(1,128)}', space=vmem, size = 0x12000, scoped, tag = 'internal scratch']
  %s0 = inlined_call_operand.hbm [shape: bf16[16,32], index: 0, kind: input, shape index: {}]
  %s1 = inlined_call_operand.hbm [shape: f32[2,2,32], index: 1, kind: input, shape index: {}]
  %s2 = inlined_call_operand.hbm [shape: f32[2,2,32], index: 2, kind: input, shape index: {}]
  %s3 = inlined_call_operand.hbm [shape: bf16[32,128], index: 3, kind: input, shape index: {}]
  %s4 = inlined_call_operand.hbm [shape: bf16[32,128], index: 4, kind: input, shape index: {}]
  %s5 = inlined_call_operand.vmem [shape: f32[1,128], index: 5, kind: input, shape index: {}]
  %s6 = inlined_call_operand.hbm [shape: bf16[64,128], index: 6, kind: input, shape index: {}]
  %s7 = inlined_call_operand.vmem [shape: f32[1,128], index: 7, kind: input, shape index: {}]
  %s8 = inlined_call_operand.hbm [shape: bf16[32,128], index: 8, kind: input, shape index: {}]
  %s9 = inlined_call_operand.vmem [shape: f32[1,128], index: 9, kind: input, shape index: {}]
  %s10 = inlined_call_operand.hbm [shape: f32[16,128], index: 10, kind: output, shape index: {0}]
  %s11 = inlined_call_operand.hbm [shape: f32[2,2,32], index: 11, kind: output, shape index: {1}]
  %s12 = inlined_call_operand.hbm [shape: f32[2,2,32], index: 12, kind: output, shape index: {2}]
  %13 = xla_tuple %s10, %s11, %s12
  %s14 = sld [smem:[#allocation0]]
  $region94: #{tpu_custom_call.1} parent=0
    _
  %s16 = ssub.s32 1, %s14
  %s17 = scalar_select 0, %s16, %s14
  $region1: #{tpu_custom_call.1} parent=0
    #allocation2 [shape = 'u8[4096]{0}', space=vmem, size = 0x1000, scoped, tag = 'input window, operand 0, single buffered']
    #allocation3 [shape = 's32[1]{0}', space=sflag, size = 0x4, scoped, tag = 'scoped memory for tpu_custom_call.1']
    #allocation4 [shape = 's32[1]{0}', space=sflag, size = 0x4, scoped, tag = 'scoped memory for tpu_custom_call.1']
    #allocation5 [shape = 'u8[2048]{0}', space=vmem, size = 0x800, scoped, tag = 'input window, operand 1, single buffered']
    #allocation6 [shape = 's32[1]{0}', space=sflag, size = 0x4, scoped, tag = 'scoped memory for tpu_custom_call.1']
    #allocation7 [shape = 'u8[2048]{0}', space=vmem, size = 0x800, scoped, tag = 'input window, operand 2, single buffered']
    #allocation8 [shape = 'u8[8192]{0}', space=vmem, size = 0x2000, scoped, tag = 'input window, operand 3, single buffered']
    #allocation9 [shape = 's32[1]{0}', space=sflag, size = 0x4, scoped, tag = 'scoped memory for tpu_custom_call.1']
    #allocation10 [shape = 'u8[8192]{0}', space=vmem, size = 0x2000, scoped, tag = 'input window, operand 4, single buffered']
    #allocation11 [shape = 'u8[16384]{0}', space=vmem, size = 0x4000, scoped, tag = 'input window, operand 6, single buffered']
    #allocation12 [shape = 's32[1]{0}', space=sflag, size = 0x4, scoped, tag = 'scoped memory for tpu_custom_call.1']
    #allocation13 [shape = 'u8[8192]{0}', space=vmem, size = 0x2000, scoped, tag = 'input window, operand 8, single buffered']
    #allocation14 [shape = 'u8[8192]{0}', space=vmem, size = 0x2000, scoped, tag = 'output window, operand 0, single buffered']
    #allocation15 [shape = 'u8[2048]{0}', space=vmem, size = 0x800, scoped, tag = 'output window, operand 1, single buffered']
    #allocation16 [shape = 's32[1]{0}', space=sflag, size = 0x4, scoped, tag = 'scoped memory for tpu_custom_call.1']
    #allocation17 [shape = 'u8[2048]{0}', space=vmem, size = 0x800, scoped, tag = 'output window, operand 2, single buffered']
    %18 = vsyncpa [#allocation3], 0
    %19 = vsyncpa [#allocation6], 0
    %20 = vsyncpa [#allocation9], 0
    %21 = vsyncpa [#allocation12], 0
    %22 = vsyncpa [#allocation4], 0
    %23 = vsyncpa [#allocation16], 0
    // Predicated region
    $region2: #{tpu_custom_call.1} parent=1 // pred_check
      _
    $region3: #{tpu_custom_call.1} parent=1 // pred_check_branch
      %25 = sbr.rel (0) target = $region5
    $region4: #{tpu_custom_call.1} parent=1 // pred_region
      %s27 = ssub.s32 128, 128
      %28 = vsyncadd [#allocation3], %s27
      %s29 = sshll.u32 [#allocation2], 4
      %s30 = int_to_ptr.vmem [resolvable:$true] %s29
      %35 = dma.hbm_to_vmem [thread:$0]  %s0, 128, %s30, [#allocation3], 64, 64, 4
    $region5: #{tpu_custom_call.1} parent=1 // pred_fallthru
      _
    // Predicated region
    $region6: #{tpu_custom_call.1} parent=1 // pred_check
      _
    $region7: #{tpu_custom_call.1} parent=1 // pred_check_branch
      %37 = sbr.rel (0) target = $region9
    $region8: #{tpu_custom_call.1} parent=1 // pred_region
      %s39 = ssub.s32 64, 64
      %40 = vsyncadd [#allocation6], %s39
      %s41 = sshll.u32 [#allocation5], 4
      %s42 = int_to_ptr.vmem [resolvable:$true] %s41
      %47 = dma.hbm_to_vmem [thread:$0]  %s1, 64, %s42, [#allocation6], 32, 32, 2
    $region9: #{tpu_custom_call.1} parent=1 // pred_fallthru
      _
    // Predicated region
    $region10: #{tpu_custom_call.1} parent=1 // pred_check
      _
    $region11: #{tpu_custom_call.1} parent=1 // pred_check_branch
      %49 = sbr.rel (0) target = $region13
    $region12: #{tpu_custom_call.1} parent=1 // pred_region
      %s51 = ssub.s32 64, 64
      %52 = vsyncadd [#allocation6], %s51
      %s53 = sshll.u32 [#allocation7], 4
      %s54 = int_to_ptr.vmem [resolvable:$true] %s53
      %59 = dma.hbm_to_vmem [thread:$0]  %s2, 64, %s54, [#allocation6], 32, 32, 2
    $region13: #{tpu_custom_call.1} parent=1 // pred_fallthru
      _
    // Predicated region
    $region14: #{tpu_custom_call.1} parent=1 // pred_check
      _
    $region15: #{tpu_custom_call.1} parent=1 // pred_check_branch
      %61 = sbr.rel (0) target = $region17
    $region16: #{tpu_custom_call.1} parent=1 // pred_region
      %s63 = ssub.s32 256, 256
      %64 = vsyncadd [#allocation9], %s63
      %s65 = sshll.u32 [#allocation8], 4
      %s66 = int_to_ptr.vmem [resolvable:$true] %s65
      %71 = dma.hbm_to_vmem [thread:$0]  %s3, 256, %s66, [#allocation9], 64, 64, 4
    $region17: #{tpu_custom_call.1} parent=1 // pred_fallthru
      _
    // Predicated region
    $region18: #{tpu_custom_call.1} parent=1 // pred_check
      _
    $region19: #{tpu_custom_call.1} parent=1 // pred_check_branch
      %73 = sbr.rel (0) target = $region21
    $region20: #{tpu_custom_call.1} parent=1 // pred_region
      %s75 = ssub.s32 256, 256
      %76 = vsyncadd [#allocation9], %s75
      %s77 = sshll.u32 [#allocation10], 4
      %s78 = int_to_ptr.vmem [resolvable:$true] %s77
      %83 = dma.hbm_to_vmem [thread:$0]  %s4, 256, %s78, [#allocation9], 64, 64, 4
    $region21: #{tpu_custom_call.1} parent=1 // pred_fallthru
      _
    // Predicated region
    $region22: #{tpu_custom_call.1} parent=1 // pred_check
      _
    $region23: #{tpu_custom_call.1} parent=1 // pred_check_branch
      %85 = sbr.rel (0) target = $region25
    $region24: #{tpu_custom_call.1} parent=1 // pred_region
      _
    $region25: #{tpu_custom_call.1} parent=1 // pred_fallthru
      _
    // Predicated region
    $region26: #{tpu_custom_call.1} parent=1 // pred_check
      _
    $region27: #{tpu_custom_call.1} parent=1 // pred_check_branch
      %87 = sbr.rel (0) target = $region29
    $region28: #{tpu_custom_call.1} parent=1 // pred_region
      %s89 = ssub.s32 512, 512
      %90 = vsyncadd [#allocation12], %s89
      %s91 = sshll.u32 [#allocation11], 4
      %s92 = int_to_ptr.vmem [resolvable:$true] %s91
      %97 = dma.hbm_to_vmem [thread:$0]  %s6, 512, %s92, [#allocation12], 64, 64, 4
    $region29: #{tpu_custom_call.1} parent=1 // pred_fallthru
      _
    // Predicated region
    $region30: #{tpu_custom_call.1} parent=1 // pred_check
      _
    $region31: #{tpu_custom_call.1} parent=1 // pred_check_branch
      %99 = sbr.rel (0) target = $region33
    $region32: #{tpu_custom_call.1} parent=1 // pred_region
      _
    $region33: #{tpu_custom_call.1} parent=1 // pred_fallthru
      _
    // Predicated region
    $region34: #{tpu_custom_call.1} parent=1 // pred_check
      _
    $region35: #{tpu_custom_call.1} parent=1 // pred_check_branch
      %101 = sbr.rel (0) target = $region37
    $region36: #{tpu_custom_call.1} parent=1 // pred_region
      %s103 = ssub.s32 256, 256
      %104 = vsyncadd [#allocation12], %s103
      %s105 = sshll.u32 [#allocation13], 4
      %s106 = int_to_ptr.vmem [resolvable:$true] %s105
      %111 = dma.hbm_to_vmem [thread:$0]  %s8, 256, %s106, [#allocation12], 64, 64, 4
    $region37: #{tpu_custom_call.1} parent=1 // pred_fallthru
      _
    // Predicated region
    $region38: #{tpu_custom_call.1} parent=1 // pred_check
      _
    $region39: #{tpu_custom_call.1} parent=1 // pred_check_branch
      %113 = sbr.rel (0) target = $region41
    $region40: #{tpu_custom_call.1} parent=1 // pred_region
      _
    $region41: #{tpu_custom_call.1} parent=1 // pred_fallthru
      _
    // Predicated region
    $region42: #{tpu_custom_call.1} parent=1 // pred_check
      _
    $region43: #{tpu_custom_call.1} parent=1 // pred_check_branch
      %115 = sbr.rel (0) target = $region45
    $region44: #{tpu_custom_call.1} parent=1 // pred_region
      %116 = dma.done [#allocation3], 128
    $region45: #{tpu_custom_call.1} parent=1 // pred_fallthru
      _
    // Predicated region
    $region46: #{tpu_custom_call.1} parent=1 // pred_check
      _
    $region47: #{tpu_custom_call.1} parent=1 // pred_check_branch
      %118 = sbr.rel (0) target = $region49
    $region48: #{tpu_custom_call.1} parent=1 // pred_region
      %119 = dma.done [#allocation6], 64
    $region49: #{tpu_custom_call.1} parent=1 // pred_fallthru
      _
    // Predicated region
    $region50: #{tpu_custom_call.1} parent=1 // pred_check
      _
    $region51: #{tpu_custom_call.1} parent=1 // pred_check_branch
      %121 = sbr.rel (0) target = $region53
    $region52: #{tpu_custom_call.1} parent=1 // pred_region
      %122 = dma.done [#allocation6], 64
    $region53: #{tpu_custom_call.1} parent=1 // pred_fallthru
      _
    // Predicated region
    $region54: #{tpu_custom_call.1} parent=1 // pred_check
      _
    $region55: #{tpu_custom_call.1} parent=1 // pred_check_branch
      %124 = sbr.rel (0) target = $region57
    $region56: #{tpu_custom_call.1} parent=1 // pred_region
      %125 = dma.done [#allocation9], 256
    $region57: #{tpu_custom_call.1} parent=1 // pred_fallthru
      _
    // Predicated region
    $region58: #{tpu_custom_call.1} parent=1 // pred_check
      _
    $region59: #{tpu_custom_call.1} parent=1 // pred_check_branch
      %127 = sbr.rel (0) target = $region61
    $region60: #{tpu_custom_call.1} parent=1 // pred_region
      %128 = dma.done [#allocation9], 256
    $region61: #{tpu_custom_call.1} parent=1 // pred_fallthru
      _
    // Predicated region
    $region62: #{tpu_custom_call.1} parent=1 // pred_check
      _
    $region63: #{tpu_custom_call.1} parent=1 // pred_check_branch
      %130 = sbr.rel (0) target = $region65
    $region64: #{tpu_custom_call.1} parent=1 // pred_region
      %131 = dma.done [#allocation12], 512
    $region65: #{tpu_custom_call.1} parent=1 // pred_fallthru
      _
    // Predicated region
    $region66: #{tpu_custom_call.1} parent=1 // pred_check
      _
    $region67: #{tpu_custom_call.1} parent=1 // pred_check_branch
      %133 = sbr.rel (0) target = $region69
    $region68: #{tpu_custom_call.1} parent=1 // pred_region
      %134 = dma.done [#allocation12], 256
    $region69: #{tpu_custom_call.1} parent=1 // pred_fallthru
      _
    %v136 = vld [vmem:[#allocation10] sm:$0xf]
    %v137 = vld [vmem:[#allocation10 + $0x4] sm:$0xf]
    %v138 = vld [vmem:[#allocation10 + $0x8] sm:$0xf]
    %v139 = vld [vmem:[#allocation10 + $0xc] sm:$0xf]
    %v140 = vld [vmem:[#allocation11] sm:$0xf]
    %v141 = vld [vmem:[#allocation11 + $0x4] sm:$0xf]
    %v142 = vld [vmem:[#allocation11 + $0x8] sm:$0xf]
    %v143 = vld [vmem:[#allocation11 + $0xc] sm:$0xf]
    %v144 = vld [vmem:[#allocation11 + $0x10] sm:$0xf]
    %v145 = vld [vmem:[#allocation11 + $0x14] sm:$0xf]
    %v146 = vld [vmem:[#allocation11 + $0x18] sm:$0xf]
    %v147 = vld [vmem:[#allocation11 + $0x1c] sm:$0xf]
    %v148 = vld [vmem:[%s7] sm:$0x1]
    %v149 = vld [vmem:[#allocation2] sm:$0xf]
    %v150 = vld [vmem:[#allocation2 + $0x4] sm:$0xf]
    %v151 = vld [vmem:[#allocation8] sm:$0xf]
    %v152 = vld [vmem:[#allocation8 + $0x4] sm:$0xf]
    %v153 = vld [vmem:[#allocation8 + $0x8] sm:$0xf]
    %v154 = vld [vmem:[#allocation8 + $0xc] sm:$0xf]
    %v155 = vld [vmem:[%s5] sm:$0x1]
    %v157 = vlaneseq
    %v158 = vshrl.u32 %v157, 7
    %v159 = vsub.s32 0, %v158
    %v160 = vrot.slane %v155, %v159
    %v164 = vunpack.c.l.b16 %v149
    %v165 = vunpack.c.l.b16 %v150
    %v166 = vpack.c.b16 %v165, %v164
    %v171 = vunpack.c.l.b16 %v151
    %v172 = vunpack.c.l.b16 %v152
    %v173 = vunpack.c.l.b16 %v153
    %v174 = vunpack.c.l.b16 %v154
    %v175 = vpack.c.b16 %v172, %v171
    %v176 = vpack.c.b16 %v174, %v173
    %vm179 = vcmask 261120
    %v181 = vsel %vm179, %v166, 0
    %183 = vmatprep.subr.bf16.mxu0 0
    %184 = vmatpush1.bf16.msra.mxu0 0
    %185 = vmatprep.subr.bf16.mxu0 0
    %186 = vmatpush1.bf16.msra.mxu0 0
    %187 = vmatprep.subr.bf16.mxu0 0
    %188 = vmatpush1.bf16.msra.mxu0 0
    %189 = vmatprep.subr.bf16.mxu0 0
    %190 = vmatpush1.bf16.msra.mxu0 0
    %191 = vmatprep.subr.bf16.mxu0 0
    %192 = vmatpush1.bf16.msra.mxu0 0
    %193 = vmatprep.subr.bf16.mxu0 0
    %194 = vmatpush1.bf16.msra.mxu0 0
    %195 = vmatprep.subr.bf16.mxu0 0
    %196 = vmatpush1.bf16.msra.mxu0 %v176
    %197 = vmatprep.subr.bf16.mxu0 0
    %198 = vmatpush1.bf16.msra.mxu0 %v175
    %199 = vmatprep.subr.bf16.mxu0 0
    %200 = vmatpush2.bf16.msra.mxu0 0
    %201 = vmatprep.subr.bf16.mxu0 0
    %202 = vmatpush2.bf16.msra.mxu0 0
    %203 = vmatprep.subr.bf16.mxu0 0
    %204 = vmatpush2.bf16.msra.mxu0 0
    %205 = vmatprep.subr.bf16.mxu0 0
    %206 = vmatpush2.bf16.msra.mxu0 0
    %207 = vmatprep.subr.bf16.mxu0 0
    %208 = vmatpush2.bf16.msra.mxu0 0
    %209 = vmatprep.subr.bf16.mxu0 0
    %210 = vmatpush2.bf16.msra.mxu0 0
    %211 = vmatprep.subr.bf16.mxu0 0
    %212 = vmatpush2.bf16.msra.mxu0 0
    %213 = vmatprep.subr.bf16.mxu0 0
    %214 = vmatpush2.bf16.msra.mxu0 0
    %215 = vmatprep.mubr.bf16.mxu0 0
    %216 = vmatmul.mubr.bf16.gmra.mxu0 %v181
    %v217 = vpop.f32.mrf.mxu0
    %v218 = vadd.f32 %v160, %v217
    %v219 = vpop.f32.mrf.mxu0
    %v220 = vpop.f32.mrf.mxu0
    %v221 = vadd.f32 %v160, %v220
    %v222 = vpop.f32.mrf.mxu0
    %223 = vdwg.mxu0
    %v224 = vld [vmem:[#allocation5] sm:$0x3]
    %s225 = scalar_lea.vmem [#allocation5], 2
    %v226 = vld [vmem:[%s225] sm:$0x3]
    %v227 = vld [vmem:[#allocation7] sm:$0x3]
    %s228 = scalar_lea.vmem [#allocation7], 2
    %v229 = vld [vmem:[%s228] sm:$0x3]
    %v230 = vpack.c.bf16 %v224, %v224
    %v235 = vunpack.c.l.b16 %v136
    %v236 = vunpack.c.l.b16 %v137
    %v237 = vunpack.c.l.b16 %v138
    %v238 = vunpack.c.l.b16 %v139
    %v239 = vpack.c.b16 %v236, %v235
    %v240 = vpack.c.b16 %v238, %v237
    %v244 = vsel %vm179, %v230, 0
    %246 = vmatprep.subr.bf16.mxu0 0
    %247 = vmatpush1.bf16.msra.mxu0 0
    %248 = vmatprep.subr.bf16.mxu0 0
    %249 = vmatpush1.bf16.msra.mxu0 0
    %250 = vmatprep.subr.bf16.mxu0 0
    %251 = vmatpush1.bf16.msra.mxu0 0
    %252 = vmatprep.subr.bf16.mxu0 0
    %253 = vmatpush1.bf16.msra.mxu0 0
    %254 = vmatprep.subr.bf16.mxu0 0
    %255 = vmatpush1.bf16.msra.mxu0 0
    %256 = vmatprep.subr.bf16.mxu0 0
    %257 = vmatpush1.bf16.msra.mxu0 0
    %258 = vmatprep.subr.bf16.mxu0 0
    %259 = vmatpush1.bf16.msra.mxu0 %v240
    %260 = vmatprep.subr.bf16.mxu0 0
    %261 = vmatpush1.bf16.msra.mxu0 %v239
    %262 = vmatprep.subr.bf16.mxu0 0
    %263 = vmatpush2.bf16.msra.mxu0 0
    %264 = vmatprep.subr.bf16.mxu0 0
    %265 = vmatpush2.bf16.msra.mxu0 0
    %266 = vmatprep.subr.bf16.mxu0 0
    %267 = vmatpush2.bf16.msra.mxu0 0
    %268 = vmatprep.subr.bf16.mxu0 0
    %269 = vmatpush2.bf16.msra.mxu0 0
    %270 = vmatprep.subr.bf16.mxu0 0
    %271 = vmatpush2.bf16.msra.mxu0 0
    %272 = vmatprep.subr.bf16.mxu0 0
    %273 = vmatpush2.bf16.msra.mxu0 0
    %274 = vmatprep.subr.bf16.mxu0 0
    %275 = vmatpush2.bf16.msra.mxu0 0
    %276 = vmatprep.subr.bf16.mxu0 0
    %277 = vmatpush2.bf16.msra.mxu0 0
    %278 = vmatprep.mubr.bf16.mxu0 0
    %279 = vmatmul.mubr.bf16.gmra.mxu0 %v244
    %v280 = vpop.f32.mrf.mxu0
    %v281 = vadd.f32 0.0, %v280
    %v282 = vpop.f32.mrf.mxu0
    %v283 = vpop.f32.mrf.mxu0
    %v284 = vpop.f32.mrf.mxu0
    %285 = vdwg.mxu0
    %v286 = vadd.f32 %v218, %v281
    %v287 = vxor.u32 %v286, 2147483648
    %v288 = vmul.f32 %v287, 1.442695
    %v289 = vpow.pop %v288
    %v290 = vadd.f32 %v289, 1.0
    %v291 = vrcp.pop %v290
    %v292 = vmul.f32 1.0, %v291
    %v293 = vmul.f32 %v292, 2.0
    %v294 = vsub.f32 %v293, 1.0
    %296 = vrot.lane.b32.xlu0 %v227, 32
    %v297 = vpop.permute.xlu0 %296
    %v299 = vmul.f32 %v292, %v297
    %301 = vrot.lane.b32.xlu0 %v294, 64
    %v302 = vpop.permute.xlu0 %301
    %v304 = vmul.f32 %v292, %v302
    %306 = vrot.lane.b32.xlu0 %v304, 32
    %v307 = vpop.permute.xlu0 %306
    %v309 = vadd.f32 %v299, %v307
    %v310 = vtanh.pop %v309
    %312 = vrot.lane.b32.xlu0 %v310, 64
    %v313 = vpop.permute.xlu0 %312
    %v315 = vmul.f32 %v292, %v313
    %v316 = vpack.c.bf16 %v315, %v315
    %318 = vrot.lane.b32.xlu0 %v316, 32
    %v319 = vpop.permute.xlu0 %318
    %v321 = vsel %vm179, %v319, 0
    %323 = vmatprep.subr.bf16.mxu0 0
    %324 = vmatpush1.bf16.msra.mxu0 0
    %325 = vmatprep.subr.bf16.mxu0 0
    %326 = vmatpush1.bf16.msra.mxu0 0
    %327 = vmatprep.subr.bf16.mxu0 0
    %328 = vmatpush1.bf16.msra.mxu0 0
    %329 = vmatprep.subr.bf16.mxu0 0
    %330 = vmatpush1.bf16.msra.mxu0 0
    %331 = vmatprep.subr.bf16.mxu0 0
    %332 = vmatpush1.bf16.msra.mxu0 0
    %333 = vmatprep.subr.bf16.mxu0 0
    %334 = vmatpush1.bf16.msra.mxu0 0
    %335 = vmatprep.subr.bf16.mxu0 0
    %336 = vmatpush1.bf16.msra.mxu0 %v240
    %337 = vmatprep.subr.bf16.mxu0 0
    %338 = vmatpush1.bf16.msra.mxu0 %v239
    %339 = vmatprep.subr.bf16.mxu0 0
    %340 = vmatpush2.bf16.msra.mxu0 0
    %341 = vmatprep.subr.bf16.mxu0 0
    %342 = vmatpush2.bf16.msra.mxu0 0
    %343 = vmatprep.subr.bf16.mxu0 0
    %344 = vmatpush2.bf16.msra.mxu0 0
    %345 = vmatprep.subr.bf16.mxu0 0
    %346 = vmatpush2.bf16.msra.mxu0 0
    %347 = vmatprep.subr.bf16.mxu0 0
    %348 = vmatpush2.bf16.msra.mxu0 0
    %349 = vmatprep.subr.bf16.mxu0 0
    %350 = vmatpush2.bf16.msra.mxu0 0
    %351 = vmatprep.subr.bf16.mxu0 0
    %352 = vmatpush2.bf16.msra.mxu0 0
    %353 = vmatprep.subr.bf16.mxu0 0
    %354 = vmatpush2.bf16.msra.mxu0 0
    %355 = vmatprep.mubr.bf16.mxu0 0
    %356 = vmatmul.mubr.bf16.gmra.mxu0 %v321
    %v357 = vpop.f32.mrf.mxu0
    %v358 = vadd.f32 0.0, %v357
    %v359 = vpop.f32.mrf.mxu0
    %v360 = vpop.f32.mrf.mxu0
    %v361 = vpop.f32.mrf.mxu0
    %362 = vdwg.mxu0
    %v364 = vrot.slane %v358, 6
    %v366 = vadd.f32 %v218, %v364
    %v367 = vxor.u32 %v366, 2147483648
    %v368 = vmul.f32 %v367, 1.442695
    %v369 = vpow.pop %v368
    %v370 = vadd.f32 %v369, 1.0
    %v371 = vrcp.pop %v370
    %v372 = vmul.f32 1.0, %v371
    %v373 = vmul.f32 %v372, 2.0
    %v374 = vsub.f32 %v373, 1.0
    %v376 = vrot.slane %v309, 6
    %v378 = vmul.f32 %v372, %v376
    %380 = vrot.lane.b32.xlu0 %v374, 64
    %v381 = vpop.permute.xlu0 %380
    %v383 = vmul.f32 %v372, %v381
    %385 = vrot.lane.b32.xlu0 %v383, 32
    %v386 = vpop.permute.xlu0 %385
    %v388 = vadd.f32 %v378, %v386
    %v389 = vtanh.pop %v388
    %391 = vrot.lane.b32.xlu0 %v389, 64
    %v392 = vpop.permute.xlu0 %391
    %v394 = vmul.f32 %v372, %v392
    %396 = vrot.lane.b32.xlu0 %v315, 32
    %v397 = vpop.permute.xlu0 %396
    %400 = vrot.lane.b32.xlu0 %v226, 32
    %v401 = vpop.permute.xlu0 %400
    %v403 = vsel %vm179, %v397, %v401
    %v404 = vpack.c.bf16 %v403, %v403
    %v406 = vlaneseq
    %v407 = vshrl.u32 %v406, 7
    %v408 = vsub.s32 0, %v407
    %v409 = vrot.slane %v148, %v408
    %v419 = vunpack.c.l.b16 %v140
    %v420 = vunpack.c.l.b16 %v141
    %v421 = vunpack.c.l.b16 %v142
    %v422 = vunpack.c.l.b16 %v143
    %v423 = vunpack.c.l.b16 %v144
    %v424 = vunpack.c.l.b16 %v145
    %v425 = vunpack.c.l.b16 %v146
    %v426 = vunpack.c.l.b16 %v147
    %v427 = vpack.c.b16 %v420, %v419
    %v428 = vpack.c.b16 %v422, %v421
    %v429 = vpack.c.b16 %v424, %v423
    %v430 = vpack.c.b16 %v426, %v425
    %vm435 = vcmask 523264
    %v437 = vsel %vm435, %v404, 0
    %439 = vmatprep.subr.bf16.mxu0 0
    %440 = vmatpush1.bf16.msra.mxu0 0
    %441 = vmatprep.subr.bf16.mxu0 0
    %442 = vmatpush1.bf16.msra.mxu0 0
    %443 = vmatprep.subr.bf16.mxu0 0
    %444 = vmatpush1.bf16.msra.mxu0 0
    %445 = vmatprep.subr.bf16.mxu0 0
    %446 = vmatpush1.bf16.msra.mxu0 0
    %447 = vmatprep.subr.bf16.mxu0 0
    %448 = vmatpush1.bf16.msra.mxu0 %v430
    %449 = vmatprep.subr.bf16.mxu0 0
    %450 = vmatpush1.bf16.msra.mxu0 %v429
    %451 = vmatprep.subr.bf16.mxu0 0
    %452 = vmatpush1.bf16.msra.mxu0 %v428
    %453 = vmatprep.subr.bf16.mxu0 0
    %454 = vmatpush1.bf16.msra.mxu0 %v427
    %455 = vmatprep.subr.bf16.mxu0 0
    %456 = vmatpush2.bf16.msra.mxu0 0
    %457 = vmatprep.subr.bf16.mxu0 0
    %458 = vmatpush2.bf16.msra.mxu0 0
    %459 = vmatprep.subr.bf16.mxu0 0
    %460 = vmatpush2.bf16.msra.mxu0 0
    %461 = vmatprep.subr.bf16.mxu0 0
    %462 = vmatpush2.bf16.msra.mxu0 0
    %463 = vmatprep.subr.bf16.mxu0 0
    %464 = vmatpush2.bf16.msra.mxu0 0
    %465 = vmatprep.subr.bf16.mxu0 0
    %466 = vmatpush2.bf16.msra.mxu0 0
    %467 = vmatprep.subr.bf16.mxu0 0
    %468 = vmatpush2.bf16.msra.mxu0 0
    %469 = vmatprep.subr.bf16.mxu0 0
    %470 = vmatpush2.bf16.msra.mxu0 0
    %471 = vmatprep.mubr.bf16.mxu0 0
    %472 = vmatmul.mubr.bf16.gmra.mxu0 %v437
    %v473 = vpop.f32.mrf.mxu0
    %v474 = vadd.f32 %v409, %v473
    %v475 = vpop.f32.mrf.mxu0
    %v476 = vpop.f32.mrf.mxu0
    %v477 = vpop.f32.mrf.mxu0
    %478 = vdwg.mxu0
    %v479 = vxor.u32 %v474, 2147483648
    %v480 = vmul.f32 %v479, 1.442695
    %v481 = vpow.pop %v480
    %v482 = vadd.f32 %v481, 1.0
    %v483 = vrcp.pop %v482
    %v484 = vmul.f32 1.0, %v483
    %v485 = vmul.f32 %v484, 2.0
    %v486 = vsub.f32 %v485, 1.0
    %488 = vrot.lane.b32.xlu0 %v229, 32
    %v489 = vpop.permute.xlu0 %488
    %v491 = vmul.f32 %v484, %v489
    %493 = vrot.lane.b32.xlu0 %v486, 64
    %v494 = vpop.permute.xlu0 %493
    %v496 = vmul.f32 %v484, %v494
    %498 = vrot.lane.b32.xlu0 %v496, 32
    %v499 = vpop.permute.xlu0 %498
    %v501 = vadd.f32 %v491, %v499
    %v502 = vtanh.pop %v501
    %504 = vrot.lane.b32.xlu0 %v502, 64
    %v505 = vpop.permute.xlu0 %504
    %v507 = vmul.f32 %v484, %v505
    %v508 = vpack.c.bf16 %v394, %v394
    %v510 = vrot.slane %v508, 1
    %511 = vrot.lane.b32.xlu0 %v510, 32
    %v512 = vpop.permute.xlu0 %511
    %v514 = vsel %vm179, %v512, 0
    %516 = vmatprep.subr.bf16.mxu0 0
    %517 = vmatpush1.bf16.msra.mxu0 0
    %518 = vmatprep.subr.bf16.mxu0 0
    %519 = vmatpush1.bf16.msra.mxu0 0
    %520 = vmatprep.subr.bf16.mxu0 0
    %521 = vmatpush1.bf16.msra.mxu0 0
    %522 = vmatprep.subr.bf16.mxu0 0
    %523 = vmatpush1.bf16.msra.mxu0 0
    %524 = vmatprep.subr.bf16.mxu0 0
    %525 = vmatpush1.bf16.msra.mxu0 0
    %526 = vmatprep.subr.bf16.mxu0 0
    %527 = vmatpush1.bf16.msra.mxu0 0
    %528 = vmatprep.subr.bf16.mxu0 0
    %529 = vmatpush1.bf16.msra.mxu0 %v240
    %530 = vmatprep.subr.bf16.mxu0 0
    %531 = vmatpush1.bf16.msra.mxu0 %v239
    %532 = vmatprep.subr.bf16.mxu0 0
    %533 = vmatpush2.bf16.msra.mxu0 0
    %534 = vmatprep.subr.bf16.mxu0 0
    %535 = vmatpush2.bf16.msra.mxu0 0
    %536 = vmatprep.subr.bf16.mxu0 0
    %537 = vmatpush2.bf16.msra.mxu0 0
    %538 = vmatprep.subr.bf16.mxu0 0
    %539 = vmatpush2.bf16.msra.mxu0 0
    %540 = vmatprep.subr.bf16.mxu0 0
    %541 = vmatpush2.bf16.msra.mxu0 0
    %542 = vmatprep.subr.bf16.mxu0 0
    %543 = vmatpush2.bf16.msra.mxu0 0
    %544 = vmatprep.subr.bf16.mxu0 0
    %545 = vmatpush2.bf16.msra.mxu0 0
    %546 = vmatprep.subr.bf16.mxu0 0
    %547 = vmatpush2.bf16.msra.mxu0 0
    %548 = vmatprep.mubr.bf16.mxu0 0
    %549 = vmatmul.mubr.bf16.gmra.mxu0 %v514
    %v550 = vpop.f32.mrf.mxu0
    %v551 = vadd.f32 0.0, %v550
    %v552 = vpop.f32.mrf.mxu0
    %v553 = vpop.f32.mrf.mxu0
    %v554 = vpop.f32.mrf.mxu0
    %555 = vdwg.mxu0
    %v557 = vrot.slane %v551, 4
    %v559 = vadd.f32 %v218, %v557
    %v560 = vxor.u32 %v559, 2147483648
    %v561 = vmul.f32 %v560, 1.442695
    %v562 = vpow.pop %v561
    %v563 = vadd.f32 %v562, 1.0
    %v564 = vrcp.pop %v563
    %v565 = vmul.f32 1.0, %v564
    %v566 = vmul.f32 %v565, 2.0
    %v567 = vsub.f32 %v566, 1.0
    %v569 = vrot.slane %v388, 6
    %v571 = vmul.f32 %v565, %v569
    %573 = vrot.lane.b32.xlu0 %v567, 64
    %v574 = vpop.permute.xlu0 %573
    %v576 = vmul.f32 %v565, %v574
    %578 = vrot.lane.b32.xlu0 %v576, 32
    %v579 = vpop.permute.xlu0 %578
    %v581 = vadd.f32 %v571, %v579
    %v582 = vtanh.pop %v581
    %584 = vrot.lane.b32.xlu0 %v582, 64
    %v585 = vpop.permute.xlu0 %584
    %v587 = vmul.f32 %v565, %v585
    %589 = vrot.lane.b32.xlu0 %v394, 32
    %v590 = vpop.permute.xlu0 %589
    %v593 = vrot.slane %v507, 6
    %594 = vrot.lane.b32.xlu0 %v593, 64
    %v595 = vpop.permute.xlu0 %594
    %v597 = vsel %vm179, %v590, %v595
    %v598 = vpack.c.bf16 %v597, %v597
    %v600 = vrot.slane %v598, 1
    %v602 = vsel %vm435, %v600, 0
    %604 = vmatprep.subr.bf16.mxu0 0
    %605 = vmatpush1.bf16.msra.mxu0 0
    %606 = vmatprep.subr.bf16.mxu0 0
    %607 = vmatpush1.bf16.msra.mxu0 0
    %608 = vmatprep.subr.bf16.mxu0 0
    %609 = vmatpush1.bf16.msra.mxu0 0
    %610 = vmatprep.subr.bf16.mxu0 0
    %611 = vmatpush1.bf16.msra.mxu0 0
    %612 = vmatprep.subr.bf16.mxu0 0
    %613 = vmatpush1.bf16.msra.mxu0 %v430
    %614 = vmatprep.subr.bf16.mxu0 0
    %615 = vmatpush1.bf16.msra.mxu0 %v429
    %616 = vmatprep.subr.bf16.mxu0 0
    %617 = vmatpush1.bf16.msra.mxu0 %v428
    %618 = vmatprep.subr.bf16.mxu0 0
    %619 = vmatpush1.bf16.msra.mxu0 %v427
    %620 = vmatprep.subr.bf16.mxu0 0
    %621 = vmatpush2.bf16.msra.mxu0 0
    %622 = vmatprep.subr.bf16.mxu0 0
    %623 = vmatpush2.bf16.msra.mxu0 0
    %624 = vmatprep.subr.bf16.mxu0 0
    %625 = vmatpush2.bf16.msra.mxu0 0
    %626 = vmatprep.subr.bf16.mxu0 0
    %627 = vmatpush2.bf16.msra.mxu0 0
    %628 = vmatprep.subr.bf16.mxu0 0
    %629 = vmatpush2.bf16.msra.mxu0 0
    %630 = vmatprep.subr.bf16.mxu0 0
    %631 = vmatpush2.bf16.msra.mxu0 0
    %632 = vmatprep.subr.bf16.mxu0 0
    %633 = vmatpush2.bf16.msra.mxu0 0
    %634 = vmatprep.subr.bf16.mxu0 0
    %635 = vmatpush2.bf16.msra.mxu0 0
    %636 = vmatprep.mubr.bf16.mxu0 0
    %637 = vmatmul.mubr.bf16.gmra.mxu0 %v602
    %v638 = vpop.f32.mrf.mxu0
    %v639 = vadd.f32 %v409, %v638
    %v640 = vpop.f32.mrf.mxu0
    %v641 = vpop.f32.mrf.mxu0
    %v642 = vpop.f32.mrf.mxu0
    %643 = vdwg.mxu0
    %v644 = vxor.u32 %v639, 2147483648
    %v645 = vmul.f32 %v644, 1.442695
    %v646 = vpow.pop %v645
    %v647 = vadd.f32 %v646, 1.0
    %v648 = vrcp.pop %v647
    %v649 = vmul.f32 1.0, %v648
    %v650 = vmul.f32 %v649, 2.0
    %v651 = vsub.f32 %v650, 1.0
    %v652 = vmul.f32 %v649, %v501
    %654 = vrot.lane.b32.xlu0 %v651, 64
    %v655 = vpop.permute.xlu0 %654
    %v657 = vmul.f32 %v649, %v655
    %659 = vrot.lane.b32.xlu0 %v657, 32
    %v660 = vpop.permute.xlu0 %659
    %v662 = vadd.f32 %v652, %v660
    %v663 = vtanh.pop %v662
    %665 = vrot.lane.b32.xlu0 %v663, 64
    %v666 = vpop.permute.xlu0 %665
    %v668 = vmul.f32 %v649, %v666
    %v669 = vpack.c.bf16 %v587, %v587
    %v671 = vrot.slane %v669, 2
    %672 = vrot.lane.b32.xlu0 %v671, 32
    %v673 = vpop.permute.xlu0 %672
    %v675 = vsel %vm179, %v673, 0
    %677 = vmatprep.subr.bf16.mxu0 0
    %678 = vmatpush1.bf16.msra.mxu0 0
    %679 = vmatprep.subr.bf16.mxu0 0
    %680 = vmatpush1.bf16.msra.mxu0 0
    %681 = vmatprep.subr.bf16.mxu0 0
    %682 = vmatpush1.bf16.msra.mxu0 0
    %683 = vmatprep.subr.bf16.mxu0 0
    %684 = vmatpush1.bf16.msra.mxu0 0
    %685 = vmatprep.subr.bf16.mxu0 0
    %686 = vmatpush1.bf16.msra.mxu0 0
    %687 = vmatprep.subr.bf16.mxu0 0
    %688 = vmatpush1.bf16.msra.mxu0 0
    %689 = vmatprep.subr.bf16.mxu0 0
    %690 = vmatpush1.bf16.msra.mxu0 %v240
    %691 = vmatprep.subr.bf16.mxu0 0
    %692 = vmatpush1.bf16.msra.mxu0 %v239
    %693 = vmatprep.subr.bf16.mxu0 0
    %694 = vmatpush2.bf16.msra.mxu0 0
    %695 = vmatprep.subr.bf16.mxu0 0
    %696 = vmatpush2.bf16.msra.mxu0 0
    %697 = vmatprep.subr.bf16.mxu0 0
    %698 = vmatpush2.bf16.msra.mxu0 0
    %699 = vmatprep.subr.bf16.mxu0 0
    %700 = vmatpush2.bf16.msra.mxu0 0
    %701 = vmatprep.subr.bf16.mxu0 0
    %702 = vmatpush2.bf16.msra.mxu0 0
    %703 = vmatprep.subr.bf16.mxu0 0
    %704 = vmatpush2.bf16.msra.mxu0 0
    %705 = vmatprep.subr.bf16.mxu0 0
    %706 = vmatpush2.bf16.msra.mxu0 0
    %707 = vmatprep.subr.bf16.mxu0 0
    %708 = vmatpush2.bf16.msra.mxu0 0
    %709 = vmatprep.mubr.bf16.mxu0 0
    %710 = vmatmul.mubr.bf16.gmra.mxu0 %v675
    %v711 = vpop.f32.mrf.mxu0
    %v712 = vadd.f32 0.0, %v711
    %v713 = vpop.f32.mrf.mxu0
    %v714 = vpop.f32.mrf.mxu0
    %v715 = vpop.f32.mrf.mxu0
    %716 = vdwg.mxu0
    %v718 = vrot.slane %v712, 2
    %v720 = vadd.f32 %v218, %v718
    %v721 = vxor.u32 %v720, 2147483648
    %v722 = vmul.f32 %v721, 1.442695
    %v723 = vpow.pop %v722
    %v724 = vadd.f32 %v723, 1.0
    %v725 = vrcp.pop %v724
    %v726 = vmul.f32 1.0, %v725
    %v727 = vmul.f32 %v726, 2.0
    %v728 = vsub.f32 %v727, 1.0
    %v730 = vrot.slane %v581, 6
    %v732 = vmul.f32 %v726, %v730
    %734 = vrot.lane.b32.xlu0 %v728, 64
    %v735 = vpop.permute.xlu0 %734
    %v737 = vmul.f32 %v726, %v735
    %739 = vrot.lane.b32.xlu0 %v737, 32
    %v740 = vpop.permute.xlu0 %739
    %v742 = vadd.f32 %v732, %v740
    %v743 = vtanh.pop %v742
    %745 = vrot.lane.b32.xlu0 %v743, 64
    %v746 = vpop.permute.xlu0 %745
    %v748 = vmul.f32 %v726, %v746
    %750 = vrot.lane.b32.xlu0 %v587, 32
    %v751 = vpop.permute.xlu0 %750
    %v754 = vrot.slane %v668, 4
    %755 = vrot.lane.b32.xlu0 %v754, 64
    %v756 = vpop.permute.xlu0 %755
    %v758 = vsel %vm179, %v751, %v756
    %v759 = vpack.c.bf16 %v758, %v758
    %v761 = vrot.slane %v759, 2
    %v763 = vsel %vm435, %v761, 0
    %765 = vmatprep.subr.bf16.mxu0 0
    %766 = vmatpush1.bf16.msra.mxu0 0
    %767 = vmatprep.subr.bf16.mxu0 0
    %768 = vmatpush1.bf16.msra.mxu0 0
    %769 = vmatprep.subr.bf16.mxu0 0
    %770 = vmatpush1.bf16.msra.mxu0 0
    %771 = vmatprep.subr.bf16.mxu0 0
    %772 = vmatpush1.bf16.msra.mxu0 0
    %773 = vmatprep.subr.bf16.mxu0 0
    %774 = vmatpush1.bf16.msra.mxu0 %v430
    %775 = vmatprep.subr.bf16.mxu0 0
    %776 = vmatpush1.bf16.msra.mxu0 %v429
    %777 = vmatprep.subr.bf16.mxu0 0
    %778 = vmatpush1.bf16.msra.mxu0 %v428
    %779 = vmatprep.subr.bf16.mxu0 0
    %780 = vmatpush1.bf16.msra.mxu0 %v427
    %781 = vmatprep.subr.bf16.mxu0 0
    %782 = vmatpush2.bf16.msra.mxu0 0
    %783 = vmatprep.subr.bf16.mxu0 0
    %784 = vmatpush2.bf16.msra.mxu0 0
    %785 = vmatprep.subr.bf16.mxu0 0
    %786 = vmatpush2.bf16.msra.mxu0 0
    %787 = vmatprep.subr.bf16.mxu0 0
    %788 = vmatpush2.bf16.msra.mxu0 0
    %789 = vmatprep.subr.bf16.mxu0 0
    %790 = vmatpush2.bf16.msra.mxu0 0
    %791 = vmatprep.subr.bf16.mxu0 0
    %792 = vmatpush2.bf16.msra.mxu0 0
    %793 = vmatprep.subr.bf16.mxu0 0
    %794 = vmatpush2.bf16.msra.mxu0 0
    %795 = vmatprep.subr.bf16.mxu0 0
    %796 = vmatpush2.bf16.msra.mxu0 0
    %797 = vmatprep.mubr.bf16.mxu0 0
    %798 = vmatmul.mubr.bf16.gmra.mxu0 %v763
    %v799 = vpop.f32.mrf.mxu0
    %v800 = vadd.f32 %v409, %v799
    %v801 = vpop.f32.mrf.mxu0
    %v802 = vpop.f32.mrf.mxu0
    %v803 = vpop.f32.mrf.mxu0
    %804 = vdwg.mxu0
    %v805 = vxor.u32 %v800, 2147483648
    %v806 = vmul.f32 %v805, 1.442695
    %v807 = vpow.pop %v806
    %v808 = vadd.f32 %v807, 1.0
    %v809 = vrcp.pop %v808
    %v810 = vmul.f32 1.0, %v809
    %v811 = vmul.f32 %v810, 2.0
    %v812 = vsub.f32 %v811, 1.0
    %v813 = vmul.f32 %v810, %v662
    %815 = vrot.lane.b32.xlu0 %v812, 64
    %v816 = vpop.permute.xlu0 %815
    %v818 = vmul.f32 %v810, %v816
    %820 = vrot.lane.b32.xlu0 %v818, 32
    %v821 = vpop.permute.xlu0 %820
    %v823 = vadd.f32 %v813, %v821
    %v824 = vtanh.pop %v823
    %826 = vrot.lane.b32.xlu0 %v824, 64
    %v827 = vpop.permute.xlu0 %826
    %v829 = vmul.f32 %v810, %v827
    %v830 = vpack.c.bf16 %v748, %v748
    %v832 = vrot.slane %v830, 3
    %833 = vrot.lane.b32.xlu0 %v832, 32
    %v834 = vpop.permute.xlu0 %833
    %v836 = vsel %vm179, %v834, 0
    %838 = vmatprep.subr.bf16.mxu0 0
    %839 = vmatpush1.bf16.msra.mxu0 0
    %840 = vmatprep.subr.bf16.mxu0 0
    %841 = vmatpush1.bf16.msra.mxu0 0
    %842 = vmatprep.subr.bf16.mxu0 0
    %843 = vmatpush1.bf16.msra.mxu0 0
    %844 = vmatprep.subr.bf16.mxu0 0
    %845 = vmatpush1.bf16.msra.mxu0 0
    %846 = vmatprep.subr.bf16.mxu0 0
    %847 = vmatpush1.bf16.msra.mxu0 0
    %848 = vmatprep.subr.bf16.mxu0 0
    %849 = vmatpush1.bf16.msra.mxu0 0
    %850 = vmatprep.subr.bf16.mxu0 0
    %851 = vmatpush1.bf16.msra.mxu0 %v240
    %852 = vmatprep.subr.bf16.mxu0 0
    %853 = vmatpush1.bf16.msra.mxu0 %v239
    %854 = vmatprep.subr.bf16.mxu0 0
    %855 = vmatpush2.bf16.msra.mxu0 0
    %856 = vmatprep.subr.bf16.mxu0 0
    %857 = vmatpush2.bf16.msra.mxu0 0
    %858 = vmatprep.subr.bf16.mxu0 0
    %859 = vmatpush2.bf16.msra.mxu0 0
    %860 = vmatprep.subr.bf16.mxu0 0
    %861 = vmatpush2.bf16.msra.mxu0 0
    %862 = vmatprep.subr.bf16.mxu0 0
    %863 = vmatpush2.bf16.msra.mxu0 0
    %864 = vmatprep.subr.bf16.mxu0 0
    %865 = vmatpush2.bf16.msra.mxu0 0
    %866 = vmatprep.subr.bf16.mxu0 0
    %867 = vmatpush2.bf16.msra.mxu0 0
    %868 = vmatprep.subr.bf16.mxu0 0
    %869 = vmatpush2.bf16.msra.mxu0 0
    %870 = vmatprep.mubr.bf16.mxu0 0
    %871 = vmatmul.mubr.bf16.gmra.mxu0 %v836
    %v872 = vpop.f32.mrf.mxu0
    %v873 = vadd.f32 0.0, %v872
    %v874 = vpop.f32.mrf.mxu0
    %v875 = vpop.f32.mrf.mxu0
    %v876 = vpop.f32.mrf.mxu0
    %877 = vdwg.mxu0
    %v878 = vadd.f32 %v221, %v873
    %v879 = vxor.u32 %v878, 2147483648
    %v880 = vmul.f32 %v879, 1.442695
    %v881 = vpow.pop %v880
    %v882 = vadd.f32 %v881, 1.0
    %v883 = vrcp.pop %v882
    %v884 = vmul.f32 1.0, %v883
    %v885 = vmul.f32 %v884, 2.0
    %v886 = vsub.f32 %v885, 1.0
    %v888 = vrot.slane %v742, 6
    %v890 = vmul.f32 %v884, %v888
    %892 = vrot.lane.b32.xlu0 %v886, 64
    %v893 = vpop.permute.xlu0 %892
    %v895 = vmul.f32 %v884, %v893
    %897 = vrot.lane.b32.xlu0 %v895, 32
    %v898 = vpop.permute.xlu0 %897
    %v900 = vadd.f32 %v890, %v898
    %v901 = vtanh.pop %v900
    %903 = vrot.lane.b32.xlu0 %v901, 64
    %v904 = vpop.permute.xlu0 %903
    %v906 = vmul.f32 %v884, %v904
    %908 = vrot.lane.b32.xlu0 %v748, 32
    %v909 = vpop.permute.xlu0 %908
    %v912 = vrot.slane %v829, 2
    %913 = vrot.lane.b32.xlu0 %v912, 64
    %v914 = vpop.permute.xlu0 %913
    %v916 = vsel %vm179, %v909, %v914
    %v917 = vpack.c.bf16 %v916, %v916
    %v919 = vrot.slane %v917, 3
    %v921 = vsel %vm435, %v919, 0
    %923 = vmatprep.subr.bf16.mxu0 0
    %924 = vmatpush1.bf16.msra.mxu0 0
    %925 = vmatprep.subr.bf16.mxu0 0
    %926 = vmatpush1.bf16.msra.mxu0 0
    %927 = vmatprep.subr.bf16.mxu0 0
    %928 = vmatpush1.bf16.msra.mxu0 0
    %929 = vmatprep.subr.bf16.mxu0 0
    %930 = vmatpush1.bf16.msra.mxu0 0
    %931 = vmatprep.subr.bf16.mxu0 0
    %932 = vmatpush1.bf16.msra.mxu0 %v430
    %933 = vmatprep.subr.bf16.mxu0 0
    %934 = vmatpush1.bf16.msra.mxu0 %v429
    %935 = vmatprep.subr.bf16.mxu0 0
    %936 = vmatpush1.bf16.msra.mxu0 %v428
    %937 = vmatprep.subr.bf16.mxu0 0
    %938 = vmatpush1.bf16.msra.mxu0 %v427
    %939 = vmatprep.subr.bf16.mxu0 0
    %940 = vmatpush2.bf16.msra.mxu0 0
    %941 = vmatprep.subr.bf16.mxu0 0
    %942 = vmatpush2.bf16.msra.mxu0 0
    %943 = vmatprep.subr.bf16.mxu0 0
    %944 = vmatpush2.bf16.msra.mxu0 0
    %945 = vmatprep.subr.bf16.mxu0 0
    %946 = vmatpush2.bf16.msra.mxu0 0
    %947 = vmatprep.subr.bf16.mxu0 0
    %948 = vmatpush2.bf16.msra.mxu0 0
    %949 = vmatprep.subr.bf16.mxu0 0
    %950 = vmatpush2.bf16.msra.mxu0 0
    %951 = vmatprep.subr.bf16.mxu0 0
    %952 = vmatpush2.bf16.msra.mxu0 0
    %953 = vmatprep.subr.bf16.mxu0 0
    %954 = vmatpush2.bf16.msra.mxu0 0
    %955 = vmatprep.mubr.bf16.mxu0 0
    %956 = vmatmul.mubr.bf16.gmra.mxu0 %v921
    %v957 = vpop.f32.mrf.mxu0
    %v958 = vadd.f32 %v409, %v957
    %v959 = vpop.f32.mrf.mxu0
    %v960 = vpop.f32.mrf.mxu0
    %v961 = vpop.f32.mrf.mxu0
    %962 = vdwg.mxu0
    %v963 = vxor.u32 %v958, 2147483648
    %v964 = vmul.f32 %v963, 1.442695
    %v965 = vpow.pop %v964
    %v966 = vadd.f32 %v965, 1.0
    %v967 = vrcp.pop %v966
    %v968 = vmul.f32 1.0, %v967
    %v969 = vmul.f32 %v968, 2.0
    %v970 = vsub.f32 %v969, 1.0
    %v971 = vmul.f32 %v968, %v823
    %973 = vrot.lane.b32.xlu0 %v970, 64
    %v974 = vpop.permute.xlu0 %973
    %v976 = vmul.f32 %v968, %v974
    %978 = vrot.lane.b32.xlu0 %v976, 32
    %v979 = vpop.permute.xlu0 %978
    %v981 = vadd.f32 %v971, %v979
    %v982 = vtanh.pop %v981
    %984 = vrot.lane.b32.xlu0 %v982, 64
    %v985 = vpop.permute.xlu0 %984
    %v987 = vmul.f32 %v968, %v985
    %v988 = vpack.c.bf16 %v906, %v906
    %990 = vrot.lane.b32.xlu0 %v988, 32
    %v991 = vpop.permute.xlu0 %990
    %v993 = vsel %vm179, %v991, 0
    %995 = vmatprep.subr.bf16.mxu0 0
    %996 = vmatpush1.bf16.msra.mxu0 0
    %997 = vmatprep.subr.bf16.mxu0 0
    %998 = vmatpush1.bf16.msra.mxu0 0
    %999 = vmatprep.subr.bf16.mxu0 0
    %1000 = vmatpush1.bf16.msra.mxu0 0
    %1001 = vmatprep.subr.bf16.mxu0 0
    %1002 = vmatpush1.bf16.msra.mxu0 0
    %1003 = vmatprep.subr.bf16.mxu0 0
    %1004 = vmatpush1.bf16.msra.mxu0 0
    %1005 = vmatprep.subr.bf16.mxu0 0
    %1006 = vmatpush1.bf16.msra.mxu0 0
    %1007 = vmatprep.subr.bf16.mxu0 0
    %1008 = vmatpush1.bf16.msra.mxu0 %v240
    %1009 = vmatprep.subr.bf16.mxu0 0
    %1010 = vmatpush1.bf16.msra.mxu0 %v239
    %1011 = vmatprep.subr.bf16.mxu0 0
    %1012 = vmatpush2.bf16.msra.mxu0 0
    %1013 = vmatprep.subr.bf16.mxu0 0
    %1014 = vmatpush2.bf16.msra.mxu0 0
    %1015 = vmatprep.subr.bf16.mxu0 0
    %1016 = vmatpush2.bf16.msra.mxu0 0
    %1017 = vmatprep.subr.bf16.mxu0 0
    %1018 = vmatpush2.bf16.msra.mxu0 0
    %1019 = vmatprep.subr.bf16.mxu0 0
    %1020 = vmatpush2.bf16.msra.mxu0 0
    %1021 = vmatprep.subr.bf16.mxu0 0
    %1022 = vmatpush2.bf16.msra.mxu0 0
    %1023 = vmatprep.subr.bf16.mxu0 0
    %1024 = vmatpush2.bf16.msra.mxu0 0
    %1025 = vmatprep.subr.bf16.mxu0 0
    %1026 = vmatpush2.bf16.msra.mxu0 0
    %1027 = vmatprep.mubr.bf16.mxu0 0
    %1028 = vmatmul.mubr.bf16.gmra.mxu0 %v993
    %v1029 = vpop.f32.mrf.mxu0
    %v1030 = vadd.f32 0.0, %v1029
    %v1031 = vpop.f32.mrf.mxu0
    %v1032 = vpop.f32.mrf.mxu0
    %v1033 = vpop.f32.mrf.mxu0
    %1034 = vdwg.mxu0
    %v1036 = vrot.slane %v1030, 6
    %v1038 = vadd.f32 %v221, %v1036
    %v1039 = vxor.u32 %v1038, 2147483648
    %v1040 = vmul.f32 %v1039, 1.442695
    %v1041 = vpow.pop %v1040
    %v1042 = vadd.f32 %v1041, 1.0
    %v1043 = vrcp.pop %v1042
    %v1044 = vmul.f32 1.0, %v1043
    %v1045 = vmul.f32 %v1044, 2.0
    %v1046 = vsub.f32 %v1045, 1.0
    %v1048 = vrot.slane %v900, 6
    %v1050 = vmul.f32 %v1044, %v1048
    %1052 = vrot.lane.b32.xlu0 %v1046, 64
    %v1053 = vpop.permute.xlu0 %1052
    %v1055 = vmul.f32 %v1044, %v1053
    %1057 = vrot.lane.b32.xlu0 %v1055, 32
    %v1058 = vpop.permute.xlu0 %1057
    %v1060 = vadd.f32 %v1050, %v1058
    %v1061 = vtanh.pop %v1060
    %1063 = vrot.lane.b32.xlu0 %v1061, 64
    %v1064 = vpop.permute.xlu0 %1063
    %v1066 = vmul.f32 %v1044, %v1064
    %1068 = vrot.lane.b32.xlu0 %v906, 32
    %v1069 = vpop.permute.xlu0 %1068
    %1072 = vrot.lane.b32.xlu0 %v987, 64
    %v1073 = vpop.permute.xlu0 %1072
    %v1075 = vsel %vm179, %v1069, %v1073
    %v1076 = vpack.c.bf16 %v1075, %v1075
    %v1078 = vsel %vm435, %v1076, 0
    %1080 = vmatprep.subr.bf16.mxu0 0
    %1081 = vmatpush1.bf16.msra.mxu0 0
    %1082 = vmatprep.subr.bf16.mxu0 0
    %1083 = vmatpush1.bf16.msra.mxu0 0
    %1084 = vmatprep.subr.bf16.mxu0 0
    %1085 = vmatpush1.bf16.msra.mxu0 0
    %1086 = vmatprep.subr.bf16.mxu0 0
    %1087 = vmatpush1.bf16.msra.mxu0 0
    %1088 = vmatprep.subr.bf16.mxu0 0
    %1089 = vmatpush1.bf16.msra.mxu0 %v430
    %1090 = vmatprep.subr.bf16.mxu0 0
    %1091 = vmatpush1.bf16.msra.mxu0 %v429
    %1092 = vmatprep.subr.bf16.mxu0 0
    %1093 = vmatpush1.bf16.msra.mxu0 %v428
    %1094 = vmatprep.subr.bf16.mxu0 0
    %1095 = vmatpush1.bf16.msra.mxu0 %v427
    %1096 = vmatprep.subr.bf16.mxu0 0
    %1097 = vmatpush2.bf16.msra.mxu0 0
    %1098 = vmatprep.subr.bf16.mxu0 0
    %1099 = vmatpush2.bf16.msra.mxu0 0
    %1100 = vmatprep.subr.bf16.mxu0 0
    %1101 = vmatpush2.bf16.msra.mxu0 0
    %1102 = vmatprep.subr.bf16.mxu0 0
    %1103 = vmatpush2.bf16.msra.mxu0 0
    %1104 = vmatprep.subr.bf16.mxu0 0
    %1105 = vmatpush2.bf16.msra.mxu0 0
    %1106 = vmatprep.subr.bf16.mxu0 0
    %1107 = vmatpush2.bf16.msra.mxu0 0
    %1108 = vmatprep.subr.bf16.mxu0 0
    %1109 = vmatpush2.bf16.msra.mxu0 0
    %1110 = vmatprep.subr.bf16.mxu0 0
    %1111 = vmatpush2.bf16.msra.mxu0 0
    %1112 = vmatprep.mubr.bf16.mxu0 0
    %1113 = vmatmul.mubr.bf16.gmra.mxu0 %v1078
    %v1114 = vpop.f32.mrf.mxu0
    %v1115 = vadd.f32 %v409, %v1114
    %v1116 = vpop.f32.mrf.mxu0
    %v1117 = vpop.f32.mrf.mxu0
    %v1118 = vpop.f32.mrf.mxu0
    %1119 = vdwg.mxu0
    %v1120 = vxor.u32 %v1115, 2147483648
    %v1121 = vmul.f32 %v1120, 1.442695
    %v1122 = vpow.pop %v1121
    %v1123 = vadd.f32 %v1122, 1.0
    %v1124 = vrcp.pop %v1123
    %v1125 = vmul.f32 1.0, %v1124
    %v1126 = vmul.f32 %v1125, 2.0
    %v1127 = vsub.f32 %v1126, 1.0
    %v1128 = vmul.f32 %v1125, %v981
    %1130 = vrot.lane.b32.xlu0 %v1127, 64
    %v1131 = vpop.permute.xlu0 %1130
    %v1133 = vmul.f32 %v1125, %v1131
    %1135 = vrot.lane.b32.xlu0 %v1133, 32
    %v1136 = vpop.permute.xlu0 %1135
    %v1138 = vadd.f32 %v1128, %v1136
    %v1139 = vtanh.pop %v1138
    %1141 = vrot.lane.b32.xlu0 %v1139, 64
    %v1142 = vpop.permute.xlu0 %1141
    %v1144 = vmul.f32 %v1125, %v1142
    %v1145 = vpack.c.bf16 %v1066, %v1066
    %v1147 = vrot.slane %v1145, 1
    %1148 = vrot.lane.b32.xlu0 %v1147, 32
    %v1149 = vpop.permute.xlu0 %1148
    %v1151 = vsel %vm179, %v1149, 0
    %1153 = vmatprep.subr.bf16.mxu0 0
    %1154 = vmatpush1.bf16.msra.mxu0 0
    %1155 = vmatprep.subr.bf16.mxu0 0
    %1156 = vmatpush1.bf16.msra.mxu0 0
    %1157 = vmatprep.subr.bf16.mxu0 0
    %1158 = vmatpush1.bf16.msra.mxu0 0
    %1159 = vmatprep.subr.bf16.mxu0 0
    %1160 = vmatpush1.bf16.msra.mxu0 0
    %1161 = vmatprep.subr.bf16.mxu0 0
    %1162 = vmatpush1.bf16.msra.mxu0 0
    %1163 = vmatprep.subr.bf16.mxu0 0
    %1164 = vmatpush1.bf16.msra.mxu0 0
    %1165 = vmatprep.subr.bf16.mxu0 0
    %1166 = vmatpush1.bf16.msra.mxu0 %v240
    %1167 = vmatprep.subr.bf16.mxu0 0
    %1168 = vmatpush1.bf16.msra.mxu0 %v239
    %1169 = vmatprep.subr.bf16.mxu0 0
    %1170 = vmatpush2.bf16.msra.mxu0 0
    %1171 = vmatprep.subr.bf16.mxu0 0
    %1172 = vmatpush2.bf16.msra.mxu0 0
    %1173 = vmatprep.subr.bf16.mxu0 0
    %1174 = vmatpush2.bf16.msra.mxu0 0
    %1175 = vmatprep.subr.bf16.mxu0 0
    %1176 = vmatpush2.bf16.msra.mxu0 0
    %1177 = vmatprep.subr.bf16.mxu0 0
    %1178 = vmatpush2.bf16.msra.mxu0 0
    %1179 = vmatprep.subr.bf16.mxu0 0
    %1180 = vmatpush2.bf16.msra.mxu0 0
    %1181 = vmatprep.subr.bf16.mxu0 0
    %1182 = vmatpush2.bf16.msra.mxu0 0
    %1183 = vmatprep.subr.bf16.mxu0 0
    %1184 = vmatpush2.bf16.msra.mxu0 0
    %1185 = vmatprep.mubr.bf16.mxu0 0
    %1186 = vmatmul.mubr.bf16.gmra.mxu0 %v1151
    %v1187 = vpop.f32.mrf.mxu0
    %v1188 = vadd.f32 0.0, %v1187
    %v1189 = vpop.f32.mrf.mxu0
    %v1190 = vpop.f32.mrf.mxu0
    %v1191 = vpop.f32.mrf.mxu0
    %1192 = vdwg.mxu0
    %v1194 = vrot.slane %v1188, 4
    %v1196 = vadd.f32 %v221, %v1194
    %v1197 = vxor.u32 %v1196, 2147483648
    %v1198 = vmul.f32 %v1197, 1.442695
    %v1199 = vpow.pop %v1198
    %v1200 = vadd.f32 %v1199, 1.0
    %v1201 = vrcp.pop %v1200
    %v1202 = vmul.f32 1.0, %v1201
    %v1203 = vmul.f32 %v1202, 2.0
    %v1204 = vsub.f32 %v1203, 1.0
    %v1206 = vrot.slane %v1060, 6
    %v1208 = vmul.f32 %v1202, %v1206
    %1210 = vrot.lane.b32.xlu0 %v1204, 64
    %v1211 = vpop.permute.xlu0 %1210
    %v1213 = vmul.f32 %v1202, %v1211
    %1215 = vrot.lane.b32.xlu0 %v1213, 32
    %v1216 = vpop.permute.xlu0 %1215
    %v1218 = vadd.f32 %v1208, %v1216
    %v1219 = vtanh.pop %v1218
    %1221 = vrot.lane.b32.xlu0 %v1219, 64
    %v1222 = vpop.permute.xlu0 %1221
    %v1224 = vmul.f32 %v1202, %v1222
    %1226 = vrot.lane.b32.xlu0 %v1066, 32
    %v1227 = vpop.permute.xlu0 %1226
    %v1230 = vrot.slane %v1144, 6
    %1231 = vrot.lane.b32.xlu0 %v1230, 64
    %v1232 = vpop.permute.xlu0 %1231
    %v1234 = vsel %vm179, %v1227, %v1232
    %v1235 = vpack.c.bf16 %v1234, %v1234
    %v1237 = vrot.slane %v1235, 1
    %v1239 = vsel %vm435, %v1237, 0
    %1241 = vmatprep.subr.bf16.mxu0 0
    %1242 = vmatpush1.bf16.msra.mxu0 0
    %1243 = vmatprep.subr.bf16.mxu0 0
    %1244 = vmatpush1.bf16.msra.mxu0 0
    %1245 = vmatprep.subr.bf16.mxu0 0
    %1246 = vmatpush1.bf16.msra.mxu0 0
    %1247 = vmatprep.subr.bf16.mxu0 0
    %1248 = vmatpush1.bf16.msra.mxu0 0
    %1249 = vmatprep.subr.bf16.mxu0 0
    %1250 = vmatpush1.bf16.msra.mxu0 %v430
    %1251 = vmatprep.subr.bf16.mxu0 0
    %1252 = vmatpush1.bf16.msra.mxu0 %v429
    %1253 = vmatprep.subr.bf16.mxu0 0
    %1254 = vmatpush1.bf16.msra.mxu0 %v428
    %1255 = vmatprep.subr.bf16.mxu0 0
    %1256 = vmatpush1.bf16.msra.mxu0 %v427
    %1257 = vmatprep.subr.bf16.mxu0 0
    %1258 = vmatpush2.bf16.msra.mxu0 0
    %1259 = vmatprep.subr.bf16.mxu0 0
    %1260 = vmatpush2.bf16.msra.mxu0 0
    %1261 = vmatprep.subr.bf16.mxu0 0
    %1262 = vmatpush2.bf16.msra.mxu0 0
    %1263 = vmatprep.subr.bf16.mxu0 0
    %1264 = vmatpush2.bf16.msra.mxu0 0
    %1265 = vmatprep.subr.bf16.mxu0 0
    %1266 = vmatpush2.bf16.msra.mxu0 0
    %1267 = vmatprep.subr.bf16.mxu0 0
    %1268 = vmatpush2.bf16.msra.mxu0 0
    %1269 = vmatprep.subr.bf16.mxu0 0
    %1270 = vmatpush2.bf16.msra.mxu0 0
    %1271 = vmatprep.subr.bf16.mxu0 0
    %1272 = vmatpush2.bf16.msra.mxu0 0
    %1273 = vmatprep.mubr.bf16.mxu0 0
    %1274 = vmatmul.mubr.bf16.gmra.mxu0 %v1239
    %v1275 = vpop.f32.mrf.mxu0
    %v1276 = vadd.f32 %v409, %v1275
    %v1277 = vpop.f32.mrf.mxu0
    %v1278 = vpop.f32.mrf.mxu0
    %v1279 = vpop.f32.mrf.mxu0
    %1280 = vdwg.mxu0
    %v1281 = vxor.u32 %v1276, 2147483648
    %v1282 = vmul.f32 %v1281, 1.442695
    %v1283 = vpow.pop %v1282
    %v1284 = vadd.f32 %v1283, 1.0
    %v1285 = vrcp.pop %v1284
    %v1286 = vmul.f32 1.0, %v1285
    %v1287 = vmul.f32 %v1286, 2.0
    %v1288 = vsub.f32 %v1287, 1.0
    %v1289 = vmul.f32 %v1286, %v1138
    %1291 = vrot.lane.b32.xlu0 %v1288, 64
    %v1292 = vpop.permute.xlu0 %1291
    %v1294 = vmul.f32 %v1286, %v1292
    %1296 = vrot.lane.b32.xlu0 %v1294, 32
    %v1297 = vpop.permute.xlu0 %1296
    %v1299 = vadd.f32 %v1289, %v1297
    %v1300 = vtanh.pop %v1299
    %1302 = vrot.lane.b32.xlu0 %v1300, 64
    %v1303 = vpop.permute.xlu0 %1302
    %v1305 = vmul.f32 %v1286, %v1303
    %v1306 = vpack.c.bf16 %v1224, %v1224
    %v1308 = vrot.slane %v1306, 2
    %1309 = vrot.lane.b32.xlu0 %v1308, 32
    %v1310 = vpop.permute.xlu0 %1309
    %v1312 = vsel %vm179, %v1310, 0
    %1314 = vmatprep.subr.bf16.mxu0 0
    %1315 = vmatpush1.bf16.msra.mxu0 0
    %1316 = vmatprep.subr.bf16.mxu0 0
    %1317 = vmatpush1.bf16.msra.mxu0 0
    %1318 = vmatprep.subr.bf16.mxu0 0
    %1319 = vmatpush1.bf16.msra.mxu0 0
    %1320 = vmatprep.subr.bf16.mxu0 0
    %1321 = vmatpush1.bf16.msra.mxu0 0
    %1322 = vmatprep.subr.bf16.mxu0 0
    %1323 = vmatpush1.bf16.msra.mxu0 0
    %1324 = vmatprep.subr.bf16.mxu0 0
    %1325 = vmatpush1.bf16.msra.mxu0 0
    %1326 = vmatprep.subr.bf16.mxu0 0
    %1327 = vmatpush1.bf16.msra.mxu0 %v240
    %1328 = vmatprep.subr.bf16.mxu0 0
    %1329 = vmatpush1.bf16.msra.mxu0 %v239
    %1330 = vmatprep.subr.bf16.mxu0 0
    %1331 = vmatpush2.bf16.msra.mxu0 0
    %1332 = vmatprep.subr.bf16.mxu0 0
    %1333 = vmatpush2.bf16.msra.mxu0 0
    %1334 = vmatprep.subr.bf16.mxu0 0
    %1335 = vmatpush2.bf16.msra.mxu0 0
    %1336 = vmatprep.subr.bf16.mxu0 0
    %1337 = vmatpush2.bf16.msra.mxu0 0
    %1338 = vmatprep.subr.bf16.mxu0 0
    %1339 = vmatpush2.bf16.msra.mxu0 0
    %1340 = vmatprep.subr.bf16.mxu0 0
    %1341 = vmatpush2.bf16.msra.mxu0 0
    %1342 = vmatprep.subr.bf16.mxu0 0
    %1343 = vmatpush2.bf16.msra.mxu0 0
    %1344 = vmatprep.subr.bf16.mxu0 0
    %1345 = vmatpush2.bf16.msra.mxu0 0
    %1346 = vmatprep.mubr.bf16.mxu0 0
    %1347 = vmatmul.mubr.bf16.gmra.mxu0 %v1312
    %v1348 = vpop.f32.mrf.mxu0
    %v1349 = vadd.f32 0.0, %v1348
    %v1350 = vpop.f32.mrf.mxu0
    %v1351 = vpop.f32.mrf.mxu0
    %v1352 = vpop.f32.mrf.mxu0
    %1353 = vdwg.mxu0
    %v1355 = vrot.slane %v1349, 2
    %v1357 = vadd.f32 %v221, %v1355
    %v1358 = vxor.u32 %v1357, 2147483648
    %v1359 = vmul.f32 %v1358, 1.442695
    %v1360 = vpow.pop %v1359
    %v1361 = vadd.f32 %v1360, 1.0
    %v1362 = vrcp.pop %v1361
    %v1363 = vmul.f32 1.0, %v1362
    %v1364 = vmul.f32 %v1363, 2.0
    %v1365 = vsub.f32 %v1364, 1.0
    %v1367 = vrot.slane %v1218, 6
    %v1369 = vmul.f32 %v1363, %v1367
    %1371 = vrot.lane.b32.xlu0 %v1365, 64
    %v1372 = vpop.permute.xlu0 %1371
    %v1374 = vmul.f32 %v1363, %v1372
    %1376 = vrot.lane.b32.xlu0 %v1374, 32
    %v1377 = vpop.permute.xlu0 %1376
    %v1379 = vadd.f32 %v1369, %v1377
    %v1380 = vtanh.pop %v1379
    %1382 = vrot.lane.b32.xlu0 %v1380, 64
    %v1383 = vpop.permute.xlu0 %1382
    %v1385 = vmul.f32 %v1363, %v1383
    %1387 = vrot.lane.b32.xlu0 %v1224, 32
    %v1388 = vpop.permute.xlu0 %1387
    %v1391 = vrot.slane %v1305, 4
    %1392 = vrot.lane.b32.xlu0 %v1391, 64
    %v1393 = vpop.permute.xlu0 %1392
    %v1395 = vsel %vm179, %v1388, %v1393
    %v1396 = vpack.c.bf16 %v1395, %v1395
    %v1398 = vrot.slane %v1396, 2
    %v1400 = vsel %vm435, %v1398, 0
    %1402 = vmatprep.subr.bf16.mxu0 0
    %1403 = vmatpush1.bf16.msra.mxu0 0
    %1404 = vmatprep.subr.bf16.mxu0 0
    %1405 = vmatpush1.bf16.msra.mxu0 0
    %1406 = vmatprep.subr.bf16.mxu0 0
    %1407 = vmatpush1.bf16.msra.mxu0 0
    %1408 = vmatprep.subr.bf16.mxu0 0
    %1409 = vmatpush1.bf16.msra.mxu0 0
    %1410 = vmatprep.subr.bf16.mxu0 0
    %1411 = vmatpush1.bf16.msra.mxu0 %v430
    %1412 = vmatprep.subr.bf16.mxu0 0
    %1413 = vmatpush1.bf16.msra.mxu0 %v429
    %1414 = vmatprep.subr.bf16.mxu0 0
    %1415 = vmatpush1.bf16.msra.mxu0 %v428
    %1416 = vmatprep.subr.bf16.mxu0 0
    %1417 = vmatpush1.bf16.msra.mxu0 %v427
    %1418 = vmatprep.subr.bf16.mxu0 0
    %1419 = vmatpush2.bf16.msra.mxu0 0
    %1420 = vmatprep.subr.bf16.mxu0 0
    %1421 = vmatpush2.bf16.msra.mxu0 0
    %1422 = vmatprep.subr.bf16.mxu0 0
    %1423 = vmatpush2.bf16.msra.mxu0 0
    %1424 = vmatprep.subr.bf16.mxu0 0
    %1425 = vmatpush2.bf16.msra.mxu0 0
    %1426 = vmatprep.subr.bf16.mxu0 0
    %1427 = vmatpush2.bf16.msra.mxu0 0
    %1428 = vmatprep.subr.bf16.mxu0 0
    %1429 = vmatpush2.bf16.msra.mxu0 0
    %1430 = vmatprep.subr.bf16.mxu0 0
    %1431 = vmatpush2.bf16.msra.mxu0 0
    %1432 = vmatprep.subr.bf16.mxu0 0
    %1433 = vmatpush2.bf16.msra.mxu0 0
    %1434 = vmatprep.mubr.bf16.mxu0 0
    %1435 = vmatmul.mubr.bf16.gmra.mxu0 %v1400
    %v1436 = vpop.f32.mrf.mxu0
    %v1437 = vadd.f32 %v409, %v1436
    %v1438 = vpop.f32.mrf.mxu0
    %v1439 = vpop.f32.mrf.mxu0
    %v1440 = vpop.f32.mrf.mxu0
    %1441 = vdwg.mxu0
    %v1442 = vxor.u32 %v1437, 2147483648
    %v1443 = vmul.f32 %v1442, 1.442695
    %v1444 = vpow.pop %v1443
    %v1445 = vadd.f32 %v1444, 1.0
    %v1446 = vrcp.pop %v1445
    %v1447 = vmul.f32 1.0, %v1446
    %v1448 = vmul.f32 %v1447, 2.0
    %v1449 = vsub.f32 %v1448, 1.0
    %v1450 = vmul.f32 %v1447, %v1299
    %1452 = vrot.lane.b32.xlu0 %v1449, 64
    %v1453 = vpop.permute.xlu0 %1452
    %v1455 = vmul.f32 %v1447, %v1453
    %1457 = vrot.lane.b32.xlu0 %v1455, 32
    %v1458 = vpop.permute.xlu0 %1457
    %v1460 = vadd.f32 %v1450, %v1458
    %v1461 = vtanh.pop %v1460
    %1463 = vrot.lane.b32.xlu0 %v1461, 64
    %v1464 = vpop.permute.xlu0 %1463
    %v1466 = vmul.f32 %v1447, %v1464
    %1468 = vrot.lane.b32.xlu0 %v1385, 32
    %v1469 = vpop.permute.xlu0 %1468
    %v1472 = vrot.slane %v1466, 2
    %1473 = vrot.lane.b32.xlu0 %v1472, 64
    %v1474 = vpop.permute.xlu0 %1473
    %v1476 = vsel %vm179, %v1469, %v1474
    %v1477 = vpack.c.bf16 %v1476, %v1476
    %v1479 = vrot.slane %v1477, 3
    %v1481 = vsel %vm435, %v1479, 0
    %1483 = vmatprep.subr.bf16.mxu0 0
    %1484 = vmatpush1.bf16.msra.mxu0 0
    %1485 = vmatprep.subr.bf16.mxu0 0
    %1486 = vmatpush1.bf16.msra.mxu0 0
    %1487 = vmatprep.subr.bf16.mxu0 0
    %1488 = vmatpush1.bf16.msra.mxu0 0
    %1489 = vmatprep.subr.bf16.mxu0 0
    %1490 = vmatpush1.bf16.msra.mxu0 0
    %1491 = vmatprep.subr.bf16.mxu0 0
    %1492 = vmatpush1.bf16.msra.mxu0 %v430
    %1493 = vmatprep.subr.bf16.mxu0 0
    %1494 = vmatpush1.bf16.msra.mxu0 %v429
    %1495 = vmatprep.subr.bf16.mxu0 0
    %1496 = vmatpush1.bf16.msra.mxu0 %v428
    %1497 = vmatprep.subr.bf16.mxu0 0
    %1498 = vmatpush1.bf16.msra.mxu0 %v427
    %1499 = vmatprep.subr.bf16.mxu0 0
    %1500 = vmatpush2.bf16.msra.mxu0 0
    %1501 = vmatprep.subr.bf16.mxu0 0
    %1502 = vmatpush2.bf16.msra.mxu0 0
    %1503 = vmatprep.subr.bf16.mxu0 0
    %1504 = vmatpush2.bf16.msra.mxu0 0
    %1505 = vmatprep.subr.bf16.mxu0 0
    %1506 = vmatpush2.bf16.msra.mxu0 0
    %1507 = vmatprep.subr.bf16.mxu0 0
    %1508 = vmatpush2.bf16.msra.mxu0 0
    %1509 = vmatprep.subr.bf16.mxu0 0
    %1510 = vmatpush2.bf16.msra.mxu0 0
    %1511 = vmatprep.subr.bf16.mxu0 0
    %1512 = vmatpush2.bf16.msra.mxu0 0
    %1513 = vmatprep.subr.bf16.mxu0 0
    %1514 = vmatpush2.bf16.msra.mxu0 0
    %1515 = vmatprep.mubr.bf16.mxu0 0
    %1516 = vmatmul.mubr.bf16.gmra.mxu0 %v1481
    %v1517 = vpop.f32.mrf.mxu0
    %v1518 = vadd.f32 %v409, %v1517
    %v1519 = vpop.f32.mrf.mxu0
    %v1520 = vpop.f32.mrf.mxu0
    %v1521 = vpop.f32.mrf.mxu0
    %1522 = vdwg.mxu0
    %v1523 = vxor.u32 %v1518, 2147483648
    %v1524 = vmul.f32 %v1523, 1.442695
    %v1525 = vpow.pop %v1524
    %v1526 = vadd.f32 %v1525, 1.0
    %v1527 = vrcp.pop %v1526
    %v1528 = vmul.f32 1.0, %v1527
    %v1529 = vmul.f32 %v1528, 2.0
    %v1530 = vsub.f32 %v1529, 1.0
    %v1531 = vmul.f32 %v1528, %v1460
    %1533 = vrot.lane.b32.xlu0 %v1530, 64
    %v1534 = vpop.permute.xlu0 %1533
    %v1536 = vmul.f32 %v1528, %v1534
    %1538 = vrot.lane.b32.xlu0 %v1536, 32
    %v1539 = vpop.permute.xlu0 %1538
    %v1541 = vadd.f32 %v1531, %v1539
    %v1542 = vtanh.pop %v1541
    %1544 = vrot.lane.b32.xlu0 %v1542, 64
    %v1545 = vpop.permute.xlu0 %1544
    %v1547 = vmul.f32 %v1528, %v1545
    %vm1548 = vcmask 261126
    %1549 = vst.msk [vmem:[#allocation15 - $0x6] sm:$0xc0] %vm1548, %v1469
    %1551 = vrot.lane.b32.xlu0 %v1379, 96
    %v1552 = vpop.permute.xlu0 %1551
    %1554 = vst.msk [vmem:[#allocation17 - $0x6] sm:$0xc0] %vm1548, %v1552
    %1556 = vrot.lane.b32.xlu0 %v1547, 32
    %v1557 = vpop.permute.xlu0 %1556
    %s1559 = scalar_lea.vmem [#allocation15], 2
    %vm1560 = vcmask 254976
    %1561 = vst.msk [vmem:[%s1559] sm:$0x3] %vm1560, %v1557
    %1563 = vrot.lane.b32.xlu0 %v1541, 96
    %v1564 = vpop.permute.xlu0 %1563
    %s1566 = scalar_lea.vmem [#allocation17], 2
    %1567 = vst.msk [vmem:[%s1566] sm:$0x3] %vm1560, %v1564
    %v1568 = vrot.slane %v668, 6
    %v1570 = vrot.slane %v829, 4
    %v1572 = vrot.slane %v987, 2
    %v1574 = vrot.slane %v1305, 6
    %v1576 = vrot.slane %v1466, 4
    %v1578 = vrot.slane %v1547, 2
    %vm1580 = vcmask 1041408
    %v1581 = vsel %vm1580, %v507, %v1568
    %vm1582 = vcmask 1043456
    %v1583 = vsel %vm1582, %v1581, %v1570
    %vm1584 = vcmask 1045504
    %v1585 = vsel %vm1584, %v1583, %v1572
    %v1586 = vsel %vm1580, %v1144, %v1574
    %v1587 = vsel %vm1582, %v1586, %v1576
    %v1588 = vsel %vm1584, %v1587, %v1578
    %v1589 = vpack.c.bf16 %v1588, %v1585
    %v1590 = vld [vmem:[#allocation13] sm:$0xf]
    %v1591 = vld [vmem:[#allocation13 + $0x4] sm:$0xf]
    %v1592 = vld [vmem:[#allocation13 + $0x8] sm:$0xf]
    %v1593 = vld [vmem:[#allocation13 + $0xc] sm:$0xf]
    %v1594 = vld [vmem:[%s9] sm:$0x1]
    %v1596 = vlaneseq
    %v1597 = vshrl.u32 %v1596, 7
    %v1598 = vsub.s32 0, %v1597
    %v1599 = vrot.slane %v1594, %v1598
    %1602 = vrot.lane.b32.xlu0 %v1589, 32
    %v1603 = vpop.permute.xlu0 %1602
    %v1608 = vunpack.c.l.b16 %v1590
    %v1609 = vunpack.c.l.b16 %v1591
    %v1610 = vunpack.c.l.b16 %v1592
    %v1611 = vunpack.c.l.b16 %v1593
    %v1612 = vpack.c.b16 %v1609, %v1608
    %v1613 = vpack.c.b16 %v1611, %v1610
    %v1617 = vsel %vm179, %v1603, 0
    %1619 = vmatprep.subr.bf16.mxu0 0
    %1620 = vmatpush1.bf16.msra.mxu0 0
    %1621 = vmatprep.subr.bf16.mxu0 0
    %1622 = vmatpush1.bf16.msra.mxu0 0
    %1623 = vmatprep.subr.bf16.mxu0 0
    %1624 = vmatpush1.bf16.msra.mxu0 0
    %1625 = vmatprep.subr.bf16.mxu0 0
    %1626 = vmatpush1.bf16.msra.mxu0 0
    %1627 = vmatprep.subr.bf16.mxu0 0
    %1628 = vmatpush1.bf16.msra.mxu0 0
    %1629 = vmatprep.subr.bf16.mxu0 0
    %1630 = vmatpush1.bf16.msra.mxu0 0
    %1631 = vmatprep.subr.bf16.mxu0 0
    %1632 = vmatpush1.bf16.msra.mxu0 %v1613
    %1633 = vmatprep.subr.bf16.mxu0 0
    %1634 = vmatpush1.bf16.msra.mxu0 %v1612
    %1635 = vmatprep.subr.bf16.mxu0 0
    %1636 = vmatpush2.bf16.msra.mxu0 0
    %1637 = vmatprep.subr.bf16.mxu0 0
    %1638 = vmatpush2.bf16.msra.mxu0 0
    %1639 = vmatprep.subr.bf16.mxu0 0
    %1640 = vmatpush2.bf16.msra.mxu0 0
    %1641 = vmatprep.subr.bf16.mxu0 0
    %1642 = vmatpush2.bf16.msra.mxu0 0
    %1643 = vmatprep.subr.bf16.mxu0 0
    %1644 = vmatpush2.bf16.msra.mxu0 0
    %1645 = vmatprep.subr.bf16.mxu0 0
    %1646 = vmatpush2.bf16.msra.mxu0 0
    %1647 = vmatprep.subr.bf16.mxu0 0
    %1648 = vmatpush2.bf16.msra.mxu0 0
    %1649 = vmatprep.subr.bf16.mxu0 0
    %1650 = vmatpush2.bf16.msra.mxu0 0
    %1651 = vmatprep.mubr.bf16.mxu0 0
    %1652 = vmatmul.mubr.bf16.gmra.mxu0 %v1617
    %v1653 = vpop.f32.mrf.mxu0
    %v1654 = vadd.f32 %v1599, %v1653
    %v1655 = vpop.f32.mrf.mxu0
    %v1656 = vpop.f32.mrf.mxu0
    %v1657 = vadd.f32 %v1599, %v1656
    %v1658 = vpop.f32.mrf.mxu0
    %1659 = vdwg.mxu0
    %1660 = vst [vmem:[#allocation14] sm:$0xff] %v1654
    %1661 = vst [vmem:[#allocation14 + $0x8] sm:$0xff] %v1657
    // Predicated region
    $region70: #{tpu_custom_call.1} parent=1 // pred_check
      _
    $region71: #{tpu_custom_call.1} parent=1 // pred_check_branch
      %1663 = sbr.rel (0) target = $region73
    $region72: #{tpu_custom_call.1} parent=1 // pred_region
      %s1665 = ssub.s32 256, 256
      %1666 = vsyncadd [#allocation4], %s1665
      %s1667 = sshll.u32 [#allocation14], 4
      %s1668 = int_to_ptr.vmem [resolvable:$true] %s1667
      %1673 = dma.vmem_to_hbm [thread:$0]  %s1668, 256, %s10, [#allocation4], 128, 128, 8
    $region73: #{tpu_custom_call.1} parent=1 // pred_fallthru
      _
    // Predicated region
    $region74: #{tpu_custom_call.1} parent=1 // pred_check
      _
    $region75: #{tpu_custom_call.1} parent=1 // pred_check_branch
      %1675 = sbr.rel (0) target = $region77
    $region76: #{tpu_custom_call.1} parent=1 // pred_region
      %s1677 = ssub.s32 64, 64
      %1678 = vsyncadd [#allocation16], %s1677
      %s1679 = sshll.u32 [#allocation15], 4
      %s1680 = int_to_ptr.vmem [resolvable:$true] %s1679
      %1685 = dma.vmem_to_hbm [thread:$0]  %s1680, 64, %s11, [#allocation16], 32, 32, 2
    $region77: #{tpu_custom_call.1} parent=1 // pred_fallthru
      _
    // Predicated region
    $region78: #{tpu_custom_call.1} parent=1 // pred_check
      _
    $region79: #{tpu_custom_call.1} parent=1 // pred_check_branch
      %1687 = sbr.rel (0) target = $region81
    $region80: #{tpu_custom_call.1} parent=1 // pred_region
      %s1689 = ssub.s32 64, 64
      %1690 = vsyncadd [#allocation16], %s1689
      %s1691 = sshll.u32 [#allocation17], 4
      %s1692 = int_to_ptr.vmem [resolvable:$true] %s1691
      %1697 = dma.vmem_to_hbm [thread:$0]  %s1692, 64, %s12, [#allocation16], 32, 32, 2
    $region81: #{tpu_custom_call.1} parent=1 // pred_fallthru
      _
    // Predicated region
    $region82: #{tpu_custom_call.1} parent=1 // pred_check
      _
    $region83: #{tpu_custom_call.1} parent=1 // pred_check_branch
      %1699 = sbr.rel (0) target = $region85
    $region84: #{tpu_custom_call.1} parent=1 // pred_region
      %1700 = dma.done [#allocation4], 256
    $region85: #{tpu_custom_call.1} parent=1 // pred_fallthru
      _
    // Predicated region
    $region86: #{tpu_custom_call.1} parent=1 // pred_check
      _
    $region87: #{tpu_custom_call.1} parent=1 // pred_check_branch
      %1702 = sbr.rel (0) target = $region89
    $region88: #{tpu_custom_call.1} parent=1 // pred_region
      %1703 = dma.done [#allocation16], 64
    $region89: #{tpu_custom_call.1} parent=1 // pred_fallthru
      _
    // Predicated region
    $region90: #{tpu_custom_call.1} parent=1 // pred_check
      _
    $region91: #{tpu_custom_call.1} parent=1 // pred_check_branch
      %1705 = sbr.rel (0) target = $region93
    $region92: #{tpu_custom_call.1} parent=1 // pred_region
      %1706 = dma.done [#allocation16], 64
    $region93: #{tpu_custom_call.1} parent=1 // pred_fallthru
      _
    %1707 = vsyncpa [#allocation3], 1
    %1708 = vsyncpa [#allocation6], 1
    %1709 = vsyncpa [#allocation9], 1
    %1710 = vsyncpa [#allocation12], 1
    %1711 = vsyncpa [#allocation4], 1
    %1712 = vsyncpa [#allocation16], 1

</llo_original>
